<compile_context>
chip_gen: v6e
topology: v6e:2x2x1
jax: 0.10.0
libtpu: 0.0.40
codegen_flags: <defaults>
</compile_context>

<pallas_src>
import math

import jax
import jax.numpy as jnp
from jax import lax
from jax.experimental import pallas as pl
from jax.experimental.pallas import tpu as pltpu


def _model_kernel(x_ref, o_ref):
    x = x_ref[...]                                      # (B, M, N) f32, resident in VMEM

    # query = softmax(x1, dim=0)  (reduction over the batch axis)
    m = jnp.max(x, axis=0, keepdims=True)
    e = jnp.exp(x - m)
    query = e / jnp.sum(e, axis=0, keepdims=True)

    # k = x1 + x1.transpose(-2, -1); symmetric per batch, so k == k^T.
    k = x + jnp.transpose(x, (0, 2, 1))

    # scaled_dot_product (up to a positive scalar):
    #   sdp[b, i, j] = sum_l query[b, i, l] * k[b, j, l]
    #               == (query @ k^T)[b, i, j] == (query @ k)[b, i, j]  (symmetry)
    # The /sqrt(M) of the PyTorch module is dropped: argmax over the last axis
    # is invariant to a positive scalar scale.
    # Kept on the VPU/XLU (broadcast-mul + lane reduce) instead of the MXU.
    sdp = jnp.sum(query[:, :, None, :] * k[:, None, :, :], axis=-1)   # (B, M, M)

    # attention_weights = argmax(sdp, dim=-1), first-occurrence tie-break.
    # (If sdp contained NaN this differs from torch.argmax; inputs here are finite.)
    max_val = jnp.max(sdp, axis=-1, keepdims=True)
    idx = lax.broadcasted_iota(jnp.int32, sdp.shape, 2)
    sentinel = jnp.int32(sdp.shape[-1])
    aw = jnp.min(jnp.where(sdp == max_val, idx, sentinel), axis=-1)   # (B, M) i32

    # output = attention_weights * x1
    # broadcast: (B, M) -> (1, B, M) against (B, M, N); requires B == M (== N)
    o_ref[...] = aw.astype(x.dtype) * x


def model_forward(x1):
    B, M, N = x1.shape
    if not (B == M == N):
        # The PyTorch module's final broadcast (attention_weights * x1) is only
        # well-defined when B == M == N; fail loudly instead of silently
        # changing semantics.
        raise ValueError(
            f"Model.forward requires B == M == N for the final broadcast; got {(B, M, N)}."
        )
    return pl.pallas_call(
        _model_kernel,
        out_shape=jax.ShapeDtypeStruct((B, M, N), x1.dtype),
        in_specs=[pl.BlockSpec(memory_space=pltpu.MemorySpace.VMEM)],
        out_specs=pl.BlockSpec(memory_space=pltpu.MemorySpace.VMEM),
    )(x1)
    # TODO(synk): if this is ever run at production sizes, replace the
    # single-block call with an M/N-tiled grid that keeps the full B extent
    # resident per block (axis-0 softmax) and re-derive block sizes for the
    # v7x 64 MiB VMEM budget.


def model_forward_ref(x1):
    """Pure-JAX reference mirroring the PyTorch forward exactly."""
    query = jax.nn.softmax(x1, axis=0)
    k = x1 + jnp.swapaxes(x1, -2, -1)
    inv_scale = math.sqrt(k.shape[1])
    sdp = jnp.matmul(query, jnp.swapaxes(k, -2, -1)) / inv_scale
    aw = jnp.argmax(sdp, axis=-1)
    return aw.astype(x1.dtype) * x1


if __name__ == "__main__":
    # B == M == N so the module's final broadcast is well-defined.
    B = M = N = 8

    rng = jax.random.PRNGKey(0)
    k_x, k_p = jax.random.split(rng)
    x1 = jax.random.normal(k_x, (B, M, N), dtype=jnp.float32)
    # `self.key` parameter: deterministically initialized; unused by forward().
    key_param = jax.random.normal(k_p, (8,), dtype=jnp.float32)

    out = model_forward(x1)
    jax.block_until_ready(out)

    ref = model_forward_ref(x1)
    assert out.shape == (B, M, N) and out.dtype == jnp.float32
    assert jnp.allclose(out, ref, atol=1e-5, rtol=1e-5)

    print("KERNEL_OK")
</pallas_src>

<mosaic_0001>
module attributes {stable_mosaic.version = 11 : i64} {
  func.func @_model_kernel(%arg0: memref<8x8x8xf32, #tpu.memory_space<vmem>>, %arg1: memref<8x8x8xf32, #tpu.memory_space<vmem>>) attributes {dimension_semantics = [], scalar_prefetch = 0 : i64, scratch_operands = 0 : i64, tpu.core_type = #tpu.core_type<tc>} {
    %c0 = arith.constant 0 : index
    %c0_0 = arith.constant 0 : index
    %c0_1 = arith.constant 0 : index
    %0 = vector.load %arg0[%c0, %c0_0, %c0_1] : memref<8x8x8xf32, #tpu.memory_space<vmem>>, vector<8x8x8xf32>
    %cst = arith.constant dense<0xFF800000> : vector<8x8xf32>
    %1 = vector.multi_reduction <maximumf>, %0, %cst [0] : vector<8x8x8xf32> to vector<8x8xf32>
    %2 = vector.shape_cast %1 : vector<8x8xf32> to vector<1x8x8xf32>
    %3 = vector.broadcast %2 : vector<1x8x8xf32> to vector<8x8x8xf32>
    %4 = arith.subf %0, %3 : vector<8x8x8xf32>
    %5 = math.exp %4 : vector<8x8x8xf32>
    %cst_2 = arith.constant dense<0.000000e+00> : vector<8x8xf32>
    %6 = vector.multi_reduction <add>, %5, %cst_2 [0] : vector<8x8x8xf32> to vector<8x8xf32>
    %7 = vector.shape_cast %6 : vector<8x8xf32> to vector<1x8x8xf32>
    %8 = vector.broadcast %7 : vector<1x8x8xf32> to vector<8x8x8xf32>
    %9 = arith.divf %5, %8 : vector<8x8x8xf32>
    %10 = tpu.transpose %0, [0, 2, 1] : vector<8x8x8xf32> -> vector<8x8x8xf32>
    %11 = arith.addf %0, %10 : vector<8x8x8xf32>
    %12 = vector.shape_cast %9 : vector<8x8x8xf32> to vector<8x8x1x8xf32>
    %13 = vector.shape_cast %11 : vector<8x8x8xf32> to vector<8x1x8x8xf32>
    %14 = vector.broadcast %12 : vector<8x8x1x8xf32> to vector<8x8x8x8xf32>
    %15 = vector.broadcast %13 : vector<8x1x8x8xf32> to vector<8x8x8x8xf32>
    %16 = arith.mulf %14, %15 : vector<8x8x8x8xf32>
    %cst_3 = arith.constant dense<0.000000e+00> : vector<8x8x8xf32>
    %17 = vector.multi_reduction <add>, %16, %cst_3 [3] : vector<8x8x8x8xf32> to vector<8x8x8xf32>
    %cst_4 = arith.constant dense<0xFF800000> : vector<8x8xf32>
    %18 = vector.multi_reduction <maximumf>, %17, %cst_4 [2] : vector<8x8x8xf32> to vector<8x8xf32>
    %19 = vector.shape_cast %18 : vector<8x8xf32> to vector<8x8x1xf32>
    %20 = tpu.iota {dimensions = array<i32: 2>} : vector<8x8x8xi32>
    %21 = vector.broadcast %19 : vector<8x8x1xf32> to vector<8x8x8xf32>
    %22 = arith.cmpf oeq, %17, %21 : vector<8x8x8xf32>
    %c8_i32 = arith.constant 8 : i32
    %23 = vector.broadcast %c8_i32 : i32 to vector<8x8x8xi32>
    %24 = arith.select %22, %20, %23 : vector<8x8x8xi1>, vector<8x8x8xi32>
    %cst_5 = arith.constant dense<2147483647> : vector<8x8xi32>
    %25 = vector.multi_reduction <minsi>, %24, %cst_5 [2] : vector<8x8x8xi32> to vector<8x8xi32>
    %26 = arith.sitofp %25 : vector<8x8xi32> to vector<8x8xf32>
    %27 = vector.shape_cast %26 : vector<8x8xf32> to vector<1x8x8xf32>
    %28 = vector.broadcast %27 : vector<1x8x8xf32> to vector<8x8x8xf32>
    %29 = arith.mulf %28, %0 : vector<8x8x8xf32>
    %c0_6 = arith.constant 0 : index
    %c0_7 = arith.constant 0 : index
    %c0_8 = arith.constant 0 : index
    %30 = vector.load %arg1[%c0_6, %c0_7, %c0_8] : memref<8x8x8xf32, #tpu.memory_space<vmem>>, vector<8x8x8xf32>
    tpu.vector_store %arg1[%c0_6, %c0_7, %c0_8], %29 {strides = array<i32>} : memref<8x8x8xf32, #tpu.memory_space<vmem>>, vector<8x8x8xf32>,
    return
  }
}

</mosaic_0001>

<llo_original>
// kernel: tpu_custom_call.1
$region0: #{tpu_custom_call.1}
  #allocation0 [shape = 'u32[]', space=smem, size = 0x4, offset = 0x4, fixed_abs, tag = 'smem constant byte address 0x4 - core index']
  #allocation1 [shape = 'u32[144,128]{1,0:T(1,128)}', space=vmem, size = 0x12000, scoped, tag = 'internal scratch']
  %s0 = inlined_call_operand.hbm [shape: f32[8,8,8], index: 0, kind: input, shape index: {}]
  %s1 = inlined_call_operand.hbm [shape: f32[8,8,8], index: 1, kind: output, shape index: {}]
  %s2 = sld [smem:[#allocation0]]
  $region18: #{tpu_custom_call.1} parent=0
    _
  %s4 = ssub.s32 1, %s2
  %s5 = scalar_select 0, %s4, %s2
  $region1: #{tpu_custom_call.1} parent=0
    #allocation2 [shape = 'u8[32768]{0}', space=vmem, size = 0x8000, scoped, tag = 'input window, operand 0, single buffered']
    #allocation3 [shape = 's32[1]{0}', space=sflag, size = 0x4, scoped, tag = 'scoped memory for tpu_custom_call.1']
    #allocation4 [shape = 's32[1]{0}', space=sflag, size = 0x4, scoped, tag = 'scoped memory for tpu_custom_call.1']
    #allocation5 [shape = 'u8[32768]{0}', space=vmem, size = 0x8000, scoped, tag = 'output window, operand 0, single buffered']
    %6 = vsyncpa [#allocation3], 0
    %7 = vsyncpa [#allocation4], 0
    // Predicated region
    $region2: #{tpu_custom_call.1} parent=1 // pred_check
      _
    $region3: #{tpu_custom_call.1} parent=1 // pred_check_branch
      %9 = sbr.rel (0) target = $region5
    $region4: #{tpu_custom_call.1} parent=1 // pred_region
      %s11 = ssub.s32 1024, 1024
      %12 = vsyncadd [#allocation3], %s11
      %s13 = sshll.u32 [#allocation2], 4
      %s14 = int_to_ptr.vmem [resolvable:$true] %s13
      %19 = dma.hbm_to_vmem [thread:$0]  %s0, 1024, %s14, [#allocation3], 128, 128, 8
    $region5: #{tpu_custom_call.1} parent=1 // pred_fallthru
      _
    // Predicated region
    $region6: #{tpu_custom_call.1} parent=1 // pred_check
      _
    $region7: #{tpu_custom_call.1} parent=1 // pred_check_branch
      %21 = sbr.rel (0) target = $region9
    $region8: #{tpu_custom_call.1} parent=1 // pred_region
      %22 = dma.done [#allocation3], 1024
    $region9: #{tpu_custom_call.1} parent=1 // pred_fallthru
      _
    %v23 = vld [vmem:[#allocation2] sm:$0xff]
    %v24 = vld [vmem:[#allocation2 + $0x8] sm:$0xff]
    %v25 = vld [vmem:[#allocation2 + $0x10] sm:$0xff]
    %v26 = vld [vmem:[#allocation2 + $0x18] sm:$0xff]
    %v27 = vld [vmem:[#allocation2 + $0x20] sm:$0xff]
    %v28 = vld [vmem:[#allocation2 + $0x28] sm:$0xff]
    %v29 = vld [vmem:[#allocation2 + $0x30] sm:$0xff]
    %v30 = vld [vmem:[#allocation2 + $0x38] sm:$0xff]
    %vm31 = vcmask 64512
    %v32 = vsel %vm31, %v23, -inf
    %v33 = vsel %vm31, %v24, -inf
    %v34 = vsel %vm31, %v25, -inf
    %v35 = vsel %vm31, %v26, -inf
    %v36 = vsel %vm31, %v27, -inf
    %v37 = vmax.f32 %v32, %v36
    %v38 = vsel %vm31, %v28, -inf
    %v39 = vmax.f32 %v33, %v38
    %v40 = vsel %vm31, %v29, -inf
    %v41 = vmax.f32 %v34, %v40
    %v42 = vsel %vm31, %v30, -inf
    %v43 = vmax.f32 %v35, %v42
    %v44 = vmax.f32 %v37, %v39
    %v45 = vmax.f32 %v41, %v43
    %v46 = vmax.f32 %v44, %v45
    %v47 = vsub.f32 %v23, %v46
    %v48 = vsub.f32 %v24, %v46
    %v49 = vsub.f32 %v25, %v46
    %v50 = vsub.f32 %v26, %v46
    %v51 = vsub.f32 %v27, %v46
    %v52 = vsub.f32 %v28, %v46
    %v53 = vsub.f32 %v29, %v46
    %v54 = vsub.f32 %v30, %v46
    %v55 = vmul.f32 %v47, 1.442695
    %v56 = vpow.pop %v55
    %v57 = vmul.f32 %v48, 1.442695
    %v58 = vpow.pop %v57
    %v59 = vmul.f32 %v49, 1.442695
    %v60 = vpow.pop %v59
    %v61 = vmul.f32 %v50, 1.442695
    %v62 = vpow.pop %v61
    %v63 = vmul.f32 %v51, 1.442695
    %v64 = vpow.pop %v63
    %v65 = vmul.f32 %v52, 1.442695
    %v66 = vpow.pop %v65
    %v67 = vmul.f32 %v53, 1.442695
    %v68 = vpow.pop %v67
    %v69 = vmul.f32 %v54, 1.442695
    %v70 = vpow.pop %v69
    %v71 = vsel %vm31, %v56, 0.0
    %v72 = vsel %vm31, %v58, 0.0
    %v73 = vadd.f32 %v71, %v72
    %v74 = vsel %vm31, %v60, 0.0
    %v75 = vadd.f32 %v73, %v74
    %v76 = vsel %vm31, %v62, 0.0
    %v77 = vadd.f32 %v75, %v76
    %v78 = vsel %vm31, %v64, 0.0
    %v79 = vadd.f32 %v77, %v78
    %v80 = vsel %vm31, %v66, 0.0
    %v81 = vadd.f32 %v79, %v80
    %v82 = vsel %vm31, %v68, 0.0
    %v83 = vadd.f32 %v81, %v82
    %v84 = vsel %vm31, %v70, 0.0
    %v85 = vadd.f32 %v83, %v84
    %v86 = vrcp.pop %v85
    %v87 = vmul.f32 %v56, %v86
    %v88 = vmul.f32 %v58, %v86
    %v89 = vmul.f32 %v60, %v86
    %v90 = vmul.f32 %v62, %v86
    %v91 = vmul.f32 %v64, %v86
    %v92 = vmul.f32 %v66, %v86
    %v93 = vmul.f32 %v68, %v86
    %v94 = vmul.f32 %v70, %v86
    %95 = vxpose.xlu0.b32.start [1/16] %v23, 128
    %96 = vxpose.xlu0.b32.cont [2/16] 0.0, 128
    %97 = vxpose.xlu0.b32.cont [3/16] 0.0, 128
    %98 = vxpose.xlu0.b32.cont [4/16] 0.0, 128
    %99 = vxpose.xlu0.b32.cont [5/16] 0.0, 128
    %100 = vxpose.xlu0.b32.cont [6/16] 0.0, 128
    %101 = vxpose.xlu0.b32.cont [7/16] 0.0, 128
    %102 = vxpose.xlu0.b32.cont [8/16] 0.0, 128
    %103 = vxpose.xlu0.b32.cont [9/16] 0.0, 128
    %104 = vxpose.xlu0.b32.cont [10/16] 0.0, 128
    %105 = vxpose.xlu0.b32.cont [11/16] 0.0, 128
    %106 = vxpose.xlu0.b32.cont [12/16] 0.0, 128
    %107 = vxpose.xlu0.b32.cont [13/16] 0.0, 128
    %108 = vxpose.xlu0.b32.cont [14/16] 0.0, 128
    %109 = vxpose.xlu0.b32.cont [15/16] 0.0, 128
    %110 = vxpose.xlu0.b32.end [16/16] 0.0, 128
    %v111 = vpop.trf.xlu0
    %v112 = vpop.trf.xlu0
    %v113 = vpop.trf.xlu0
    %v114 = vpop.trf.xlu0
    %v115 = vpop.trf.xlu0
    %v116 = vpop.trf.xlu0
    %v117 = vpop.trf.xlu0
    %v118 = vpop.trf.xlu0
    %v119 = vpop.trf.xlu0
    %v120 = vpop.trf.xlu0
    %v121 = vpop.trf.xlu0
    %v122 = vpop.trf.xlu0
    %v123 = vpop.trf.xlu0
    %v124 = vpop.trf.xlu0
    %v125 = vpop.trf.xlu0
    %v126 = vpop.trf.xlu0
    %127 = vxpose.xlu0.b32.start [1/16] %v24, 128
    %128 = vxpose.xlu0.b32.cont [2/16] 0.0, 128
    %129 = vxpose.xlu0.b32.cont [3/16] 0.0, 128
    %130 = vxpose.xlu0.b32.cont [4/16] 0.0, 128
    %131 = vxpose.xlu0.b32.cont [5/16] 0.0, 128
    %132 = vxpose.xlu0.b32.cont [6/16] 0.0, 128
    %133 = vxpose.xlu0.b32.cont [7/16] 0.0, 128
    %134 = vxpose.xlu0.b32.cont [8/16] 0.0, 128
    %135 = vxpose.xlu0.b32.cont [9/16] 0.0, 128
    %136 = vxpose.xlu0.b32.cont [10/16] 0.0, 128
    %137 = vxpose.xlu0.b32.cont [11/16] 0.0, 128
    %138 = vxpose.xlu0.b32.cont [12/16] 0.0, 128
    %139 = vxpose.xlu0.b32.cont [13/16] 0.0, 128
    %140 = vxpose.xlu0.b32.cont [14/16] 0.0, 128
    %141 = vxpose.xlu0.b32.cont [15/16] 0.0, 128
    %142 = vxpose.xlu0.b32.end [16/16] 0.0, 128
    %v143 = vpop.trf.xlu0
    %v144 = vpop.trf.xlu0
    %v145 = vpop.trf.xlu0
    %v146 = vpop.trf.xlu0
    %v147 = vpop.trf.xlu0
    %v148 = vpop.trf.xlu0
    %v149 = vpop.trf.xlu0
    %v150 = vpop.trf.xlu0
    %v151 = vpop.trf.xlu0
    %v152 = vpop.trf.xlu0
    %v153 = vpop.trf.xlu0
    %v154 = vpop.trf.xlu0
    %v155 = vpop.trf.xlu0
    %v156 = vpop.trf.xlu0
    %v157 = vpop.trf.xlu0
    %v158 = vpop.trf.xlu0
    %159 = vxpose.xlu0.b32.start [1/16] %v25, 128
    %160 = vxpose.xlu0.b32.cont [2/16] 0.0, 128
    %161 = vxpose.xlu0.b32.cont [3/16] 0.0, 128
    %162 = vxpose.xlu0.b32.cont [4/16] 0.0, 128
    %163 = vxpose.xlu0.b32.cont [5/16] 0.0, 128
    %164 = vxpose.xlu0.b32.cont [6/16] 0.0, 128
    %165 = vxpose.xlu0.b32.cont [7/16] 0.0, 128
    %166 = vxpose.xlu0.b32.cont [8/16] 0.0, 128
    %167 = vxpose.xlu0.b32.cont [9/16] 0.0, 128
    %168 = vxpose.xlu0.b32.cont [10/16] 0.0, 128
    %169 = vxpose.xlu0.b32.cont [11/16] 0.0, 128
    %170 = vxpose.xlu0.b32.cont [12/16] 0.0, 128
    %171 = vxpose.xlu0.b32.cont [13/16] 0.0, 128
    %172 = vxpose.xlu0.b32.cont [14/16] 0.0, 128
    %173 = vxpose.xlu0.b32.cont [15/16] 0.0, 128
    %174 = vxpose.xlu0.b32.end [16/16] 0.0, 128
    %v175 = vpop.trf.xlu0
    %v176 = vpop.trf.xlu0
    %v177 = vpop.trf.xlu0
    %v178 = vpop.trf.xlu0
    %v179 = vpop.trf.xlu0
    %v180 = vpop.trf.xlu0
    %v181 = vpop.trf.xlu0
    %v182 = vpop.trf.xlu0
    %v183 = vpop.trf.xlu0
    %v184 = vpop.trf.xlu0
    %v185 = vpop.trf.xlu0
    %v186 = vpop.trf.xlu0
    %v187 = vpop.trf.xlu0
    %v188 = vpop.trf.xlu0
    %v189 = vpop.trf.xlu0
    %v190 = vpop.trf.xlu0
    %191 = vxpose.xlu0.b32.start [1/16] %v26, 128
    %192 = vxpose.xlu0.b32.cont [2/16] 0.0, 128
    %193 = vxpose.xlu0.b32.cont [3/16] 0.0, 128
    %194 = vxpose.xlu0.b32.cont [4/16] 0.0, 128
    %195 = vxpose.xlu0.b32.cont [5/16] 0.0, 128
    %196 = vxpose.xlu0.b32.cont [6/16] 0.0, 128
    %197 = vxpose.xlu0.b32.cont [7/16] 0.0, 128
    %198 = vxpose.xlu0.b32.cont [8/16] 0.0, 128
    %199 = vxpose.xlu0.b32.cont [9/16] 0.0, 128
    %200 = vxpose.xlu0.b32.cont [10/16] 0.0, 128
    %201 = vxpose.xlu0.b32.cont [11/16] 0.0, 128
    %202 = vxpose.xlu0.b32.cont [12/16] 0.0, 128
    %203 = vxpose.xlu0.b32.cont [13/16] 0.0, 128
    %204 = vxpose.xlu0.b32.cont [14/16] 0.0, 128
    %205 = vxpose.xlu0.b32.cont [15/16] 0.0, 128
    %206 = vxpose.xlu0.b32.end [16/16] 0.0, 128
    %v207 = vpop.trf.xlu0
    %v208 = vpop.trf.xlu0
    %v209 = vpop.trf.xlu0
    %v210 = vpop.trf.xlu0
    %v211 = vpop.trf.xlu0
    %v212 = vpop.trf.xlu0
    %v213 = vpop.trf.xlu0
    %v214 = vpop.trf.xlu0
    %v215 = vpop.trf.xlu0
    %v216 = vpop.trf.xlu0
    %v217 = vpop.trf.xlu0
    %v218 = vpop.trf.xlu0
    %v219 = vpop.trf.xlu0
    %v220 = vpop.trf.xlu0
    %v221 = vpop.trf.xlu0
    %v222 = vpop.trf.xlu0
    %223 = vxpose.xlu0.b32.start [1/16] %v27, 128
    %224 = vxpose.xlu0.b32.cont [2/16] 0.0, 128
    %225 = vxpose.xlu0.b32.cont [3/16] 0.0, 128
    %226 = vxpose.xlu0.b32.cont [4/16] 0.0, 128
    %227 = vxpose.xlu0.b32.cont [5/16] 0.0, 128
    %228 = vxpose.xlu0.b32.cont [6/16] 0.0, 128
    %229 = vxpose.xlu0.b32.cont [7/16] 0.0, 128
    %230 = vxpose.xlu0.b32.cont [8/16] 0.0, 128
    %231 = vxpose.xlu0.b32.cont [9/16] 0.0, 128
    %232 = vxpose.xlu0.b32.cont [10/16] 0.0, 128
    %233 = vxpose.xlu0.b32.cont [11/16] 0.0, 128
    %234 = vxpose.xlu0.b32.cont [12/16] 0.0, 128
    %235 = vxpose.xlu0.b32.cont [13/16] 0.0, 128
    %236 = vxpose.xlu0.b32.cont [14/16] 0.0, 128
    %237 = vxpose.xlu0.b32.cont [15/16] 0.0, 128
    %238 = vxpose.xlu0.b32.end [16/16] 0.0, 128
    %v239 = vpop.trf.xlu0
    %v240 = vpop.trf.xlu0
    %v241 = vpop.trf.xlu0
    %v242 = vpop.trf.xlu0
    %v243 = vpop.trf.xlu0
    %v244 = vpop.trf.xlu0
    %v245 = vpop.trf.xlu0
    %v246 = vpop.trf.xlu0
    %v247 = vpop.trf.xlu0
    %v248 = vpop.trf.xlu0
    %v249 = vpop.trf.xlu0
    %v250 = vpop.trf.xlu0
    %v251 = vpop.trf.xlu0
    %v252 = vpop.trf.xlu0
    %v253 = vpop.trf.xlu0
    %v254 = vpop.trf.xlu0
    %255 = vxpose.xlu0.b32.start [1/16] %v28, 128
    %256 = vxpose.xlu0.b32.cont [2/16] 0.0, 128
    %257 = vxpose.xlu0.b32.cont [3/16] 0.0, 128
    %258 = vxpose.xlu0.b32.cont [4/16] 0.0, 128
    %259 = vxpose.xlu0.b32.cont [5/16] 0.0, 128
    %260 = vxpose.xlu0.b32.cont [6/16] 0.0, 128
    %261 = vxpose.xlu0.b32.cont [7/16] 0.0, 128
    %262 = vxpose.xlu0.b32.cont [8/16] 0.0, 128
    %263 = vxpose.xlu0.b32.cont [9/16] 0.0, 128
    %264 = vxpose.xlu0.b32.cont [10/16] 0.0, 128
    %265 = vxpose.xlu0.b32.cont [11/16] 0.0, 128
    %266 = vxpose.xlu0.b32.cont [12/16] 0.0, 128
    %267 = vxpose.xlu0.b32.cont [13/16] 0.0, 128
    %268 = vxpose.xlu0.b32.cont [14/16] 0.0, 128
    %269 = vxpose.xlu0.b32.cont [15/16] 0.0, 128
    %270 = vxpose.xlu0.b32.end [16/16] 0.0, 128
    %v271 = vpop.trf.xlu0
    %v272 = vpop.trf.xlu0
    %v273 = vpop.trf.xlu0
    %v274 = vpop.trf.xlu0
    %v275 = vpop.trf.xlu0
    %v276 = vpop.trf.xlu0
    %v277 = vpop.trf.xlu0
    %v278 = vpop.trf.xlu0
    %v279 = vpop.trf.xlu0
    %v280 = vpop.trf.xlu0
    %v281 = vpop.trf.xlu0
    %v282 = vpop.trf.xlu0
    %v283 = vpop.trf.xlu0
    %v284 = vpop.trf.xlu0
    %v285 = vpop.trf.xlu0
    %v286 = vpop.trf.xlu0
    %287 = vxpose.xlu0.b32.start [1/16] %v29, 128
    %288 = vxpose.xlu0.b32.cont [2/16] 0.0, 128
    %289 = vxpose.xlu0.b32.cont [3/16] 0.0, 128
    %290 = vxpose.xlu0.b32.cont [4/16] 0.0, 128
    %291 = vxpose.xlu0.b32.cont [5/16] 0.0, 128
    %292 = vxpose.xlu0.b32.cont [6/16] 0.0, 128
    %293 = vxpose.xlu0.b32.cont [7/16] 0.0, 128
    %294 = vxpose.xlu0.b32.cont [8/16] 0.0, 128
    %295 = vxpose.xlu0.b32.cont [9/16] 0.0, 128
    %296 = vxpose.xlu0.b32.cont [10/16] 0.0, 128
    %297 = vxpose.xlu0.b32.cont [11/16] 0.0, 128
    %298 = vxpose.xlu0.b32.cont [12/16] 0.0, 128
    %299 = vxpose.xlu0.b32.cont [13/16] 0.0, 128
    %300 = vxpose.xlu0.b32.cont [14/16] 0.0, 128
    %301 = vxpose.xlu0.b32.cont [15/16] 0.0, 128
    %302 = vxpose.xlu0.b32.end [16/16] 0.0, 128
    %v303 = vpop.trf.xlu0
    %v304 = vpop.trf.xlu0
    %v305 = vpop.trf.xlu0
    %v306 = vpop.trf.xlu0
    %v307 = vpop.trf.xlu0
    %v308 = vpop.trf.xlu0
    %v309 = vpop.trf.xlu0
    %v310 = vpop.trf.xlu0
    %v311 = vpop.trf.xlu0
    %v312 = vpop.trf.xlu0
    %v313 = vpop.trf.xlu0
    %v314 = vpop.trf.xlu0
    %v315 = vpop.trf.xlu0
    %v316 = vpop.trf.xlu0
    %v317 = vpop.trf.xlu0
    %v318 = vpop.trf.xlu0
    %319 = vxpose.xlu0.b32.start [1/16] %v30, 128
    %320 = vxpose.xlu0.b32.cont [2/16] 0.0, 128
    %321 = vxpose.xlu0.b32.cont [3/16] 0.0, 128
    %322 = vxpose.xlu0.b32.cont [4/16] 0.0, 128
    %323 = vxpose.xlu0.b32.cont [5/16] 0.0, 128
    %324 = vxpose.xlu0.b32.cont [6/16] 0.0, 128
    %325 = vxpose.xlu0.b32.cont [7/16] 0.0, 128
    %326 = vxpose.xlu0.b32.cont [8/16] 0.0, 128
    %327 = vxpose.xlu0.b32.cont [9/16] 0.0, 128
    %328 = vxpose.xlu0.b32.cont [10/16] 0.0, 128
    %329 = vxpose.xlu0.b32.cont [11/16] 0.0, 128
    %330 = vxpose.xlu0.b32.cont [12/16] 0.0, 128
    %331 = vxpose.xlu0.b32.cont [13/16] 0.0, 128
    %332 = vxpose.xlu0.b32.cont [14/16] 0.0, 128
    %333 = vxpose.xlu0.b32.cont [15/16] 0.0, 128
    %334 = vxpose.xlu0.b32.end [16/16] 0.0, 128
    %v335 = vpop.trf.xlu0
    %v336 = vpop.trf.xlu0
    %v337 = vpop.trf.xlu0
    %v338 = vpop.trf.xlu0
    %v339 = vpop.trf.xlu0
    %v340 = vpop.trf.xlu0
    %v341 = vpop.trf.xlu0
    %v342 = vpop.trf.xlu0
    %v343 = vpop.trf.xlu0
    %v344 = vpop.trf.xlu0
    %v345 = vpop.trf.xlu0
    %v346 = vpop.trf.xlu0
    %v347 = vpop.trf.xlu0
    %v348 = vpop.trf.xlu0
    %v349 = vpop.trf.xlu0
    %v350 = vpop.trf.xlu0
    %v351 = vadd.f32 %v23, %v111
    %v352 = vadd.f32 %v24, %v143
    %v353 = vadd.f32 %v25, %v175
    %v354 = vadd.f32 %v26, %v207
    %v355 = vadd.f32 %v27, %v239
    %v356 = vadd.f32 %v28, %v271
    %v357 = vadd.f32 %v29, %v303
    %v358 = vadd.f32 %v30, %v335
    %v367 = vcombine.high %v87, %v87
    %v369 = vunpack.c.l.s4 1966171168
    %v370 = vunpack.c.0.s8 %v369
    %v371 = vlaneseq
    %v372 = vshrl.u32 %v371, 7
    %v373 = vsub.s32 %v370, %v372
    %v374 = vrot.slane %v87, %v373
    %v376 = vunpack.c.l.s4 1966171168
    %v377 = vunpack.c.0.s8 %v376
    %v378 = vlaneseq
    %v379 = vshrl.u32 %v378, 7
    %v380 = vsub.s32 %v377, %v379
    %v381 = vrot.slane %v367, %v380
    %v382 = vcombine.high %v374, %v374
    %v383 = vcombine.high %v381, %v381
    %v385 = vunpack.c.l.s4 1966171168
    %v386 = vunpack.c.0.s8 %v385
    %v387 = vlaneseq
    %v388 = vshrl.u32 %v387, 7
    %v389 = vsub.s32 %v386, %v388
    %v390 = vrot.slane %v374, %v389
    %v392 = vunpack.c.l.s4 1966171168
    %v393 = vunpack.c.0.s8 %v392
    %v394 = vlaneseq
    %v395 = vshrl.u32 %v394, 7
    %v396 = vsub.s32 %v393, %v395
    %v397 = vrot.slane %v381, %v396
    %v399 = vunpack.c.l.s4 1966171168
    %v400 = vunpack.c.0.s8 %v399
    %v401 = vlaneseq
    %v402 = vshrl.u32 %v401, 7
    %v403 = vsub.s32 %v400, %v402
    %v404 = vrot.slane %v382, %v403
    %v406 = vunpack.c.l.s4 1966171168
    %v407 = vunpack.c.0.s8 %v406
    %v408 = vlaneseq
    %v409 = vshrl.u32 %v408, 7
    %v410 = vsub.s32 %v407, %v409
    %v411 = vrot.slane %v383, %v410
    %v412 = vcombine.high %v390, %v390
    %v413 = vcombine.high %v397, %v397
    %v414 = vcombine.high %v404, %v404
    %v415 = vcombine.high %v411, %v411
    %v416 = vcombine.high %v88, %v88
    %v418 = vunpack.c.l.s4 1966171168
    %v419 = vunpack.c.0.s8 %v418
    %v420 = vlaneseq
    %v421 = vshrl.u32 %v420, 7
    %v422 = vsub.s32 %v419, %v421
    %v423 = vrot.slane %v88, %v422
    %v425 = vunpack.c.l.s4 1966171168
    %v426 = vunpack.c.0.s8 %v425
    %v427 = vlaneseq
    %v428 = vshrl.u32 %v427, 7
    %v429 = vsub.s32 %v426, %v428
    %v430 = vrot.slane %v416, %v429
    %v431 = vcombine.high %v423, %v423
    %v432 = vcombine.high %v430, %v430
    %v434 = vunpack.c.l.s4 1966171168
    %v435 = vunpack.c.0.s8 %v434
    %v436 = vlaneseq
    %v437 = vshrl.u32 %v436, 7
    %v438 = vsub.s32 %v435, %v437
    %v439 = vrot.slane %v423, %v438
    %v441 = vunpack.c.l.s4 1966171168
    %v442 = vunpack.c.0.s8 %v441
    %v443 = vlaneseq
    %v444 = vshrl.u32 %v443, 7
    %v445 = vsub.s32 %v442, %v444
    %v446 = vrot.slane %v430, %v445
    %v448 = vunpack.c.l.s4 1966171168
    %v449 = vunpack.c.0.s8 %v448
    %v450 = vlaneseq
    %v451 = vshrl.u32 %v450, 7
    %v452 = vsub.s32 %v449, %v451
    %v453 = vrot.slane %v431, %v452
    %v455 = vunpack.c.l.s4 1966171168
    %v456 = vunpack.c.0.s8 %v455
    %v457 = vlaneseq
    %v458 = vshrl.u32 %v457, 7
    %v459 = vsub.s32 %v456, %v458
    %v460 = vrot.slane %v432, %v459
    %v461 = vcombine.high %v439, %v439
    %v462 = vcombine.high %v446, %v446
    %v463 = vcombine.high %v453, %v453
    %v464 = vcombine.high %v460, %v460
    %v465 = vcombine.high %v89, %v89
    %v467 = vunpack.c.l.s4 1966171168
    %v468 = vunpack.c.0.s8 %v467
    %v469 = vlaneseq
    %v470 = vshrl.u32 %v469, 7
    %v471 = vsub.s32 %v468, %v470
    %v472 = vrot.slane %v89, %v471
    %v474 = vunpack.c.l.s4 1966171168
    %v475 = vunpack.c.0.s8 %v474
    %v476 = vlaneseq
    %v477 = vshrl.u32 %v476, 7
    %v478 = vsub.s32 %v475, %v477
    %v479 = vrot.slane %v465, %v478
    %v480 = vcombine.high %v472, %v472
    %v481 = vcombine.high %v479, %v479
    %v483 = vunpack.c.l.s4 1966171168
    %v484 = vunpack.c.0.s8 %v483
    %v485 = vlaneseq
    %v486 = vshrl.u32 %v485, 7
    %v487 = vsub.s32 %v484, %v486
    %v488 = vrot.slane %v472, %v487
    %v490 = vunpack.c.l.s4 1966171168
    %v491 = vunpack.c.0.s8 %v490
    %v492 = vlaneseq
    %v493 = vshrl.u32 %v492, 7
    %v494 = vsub.s32 %v491, %v493
    %v495 = vrot.slane %v479, %v494
    %v497 = vunpack.c.l.s4 1966171168
    %v498 = vunpack.c.0.s8 %v497
    %v499 = vlaneseq
    %v500 = vshrl.u32 %v499, 7
    %v501 = vsub.s32 %v498, %v500
    %v502 = vrot.slane %v480, %v501
    %v504 = vunpack.c.l.s4 1966171168
    %v505 = vunpack.c.0.s8 %v504
    %v506 = vlaneseq
    %v507 = vshrl.u32 %v506, 7
    %v508 = vsub.s32 %v505, %v507
    %v509 = vrot.slane %v481, %v508
    %v510 = vcombine.high %v488, %v488
    %v511 = vcombine.high %v495, %v495
    %v512 = vcombine.high %v502, %v502
    %v513 = vcombine.high %v509, %v509
    %v514 = vcombine.high %v90, %v90
    %v516 = vunpack.c.l.s4 1966171168
    %v517 = vunpack.c.0.s8 %v516
    %v518 = vlaneseq
    %v519 = vshrl.u32 %v518, 7
    %v520 = vsub.s32 %v517, %v519
    %v521 = vrot.slane %v90, %v520
    %v523 = vunpack.c.l.s4 1966171168
    %v524 = vunpack.c.0.s8 %v523
    %v525 = vlaneseq
    %v526 = vshrl.u32 %v525, 7
    %v527 = vsub.s32 %v524, %v526
    %v528 = vrot.slane %v514, %v527
    %v529 = vcombine.high %v521, %v521
    %v530 = vcombine.high %v528, %v528
    %v532 = vunpack.c.l.s4 1966171168
    %v533 = vunpack.c.0.s8 %v532
    %v534 = vlaneseq
    %v535 = vshrl.u32 %v534, 7
    %v536 = vsub.s32 %v533, %v535
    %v537 = vrot.slane %v521, %v536
    %v539 = vunpack.c.l.s4 1966171168
    %v540 = vunpack.c.0.s8 %v539
    %v541 = vlaneseq
    %v542 = vshrl.u32 %v541, 7
    %v543 = vsub.s32 %v540, %v542
    %v544 = vrot.slane %v528, %v543
    %v546 = vunpack.c.l.s4 1966171168
    %v547 = vunpack.c.0.s8 %v546
    %v548 = vlaneseq
    %v549 = vshrl.u32 %v548, 7
    %v550 = vsub.s32 %v547, %v549
    %v551 = vrot.slane %v529, %v550
    %v553 = vunpack.c.l.s4 1966171168
    %v554 = vunpack.c.0.s8 %v553
    %v555 = vlaneseq
    %v556 = vshrl.u32 %v555, 7
    %v557 = vsub.s32 %v554, %v556
    %v558 = vrot.slane %v530, %v557
    %v559 = vcombine.high %v537, %v537
    %v560 = vcombine.high %v544, %v544
    %v561 = vcombine.high %v551, %v551
    %v562 = vcombine.high %v558, %v558
    %v563 = vcombine.high %v91, %v91
    %v565 = vunpack.c.l.s4 1966171168
    %v566 = vunpack.c.0.s8 %v565
    %v567 = vlaneseq
    %v568 = vshrl.u32 %v567, 7
    %v569 = vsub.s32 %v566, %v568
    %v570 = vrot.slane %v91, %v569
    %v572 = vunpack.c.l.s4 1966171168
    %v573 = vunpack.c.0.s8 %v572
    %v574 = vlaneseq
    %v575 = vshrl.u32 %v574, 7
    %v576 = vsub.s32 %v573, %v575
    %v577 = vrot.slane %v563, %v576
    %v578 = vcombine.high %v570, %v570
    %v579 = vcombine.high %v577, %v577
    %v581 = vunpack.c.l.s4 1966171168
    %v582 = vunpack.c.0.s8 %v581
    %v583 = vlaneseq
    %v584 = vshrl.u32 %v583, 7
    %v585 = vsub.s32 %v582, %v584
    %v586 = vrot.slane %v570, %v585
    %v588 = vunpack.c.l.s4 1966171168
    %v589 = vunpack.c.0.s8 %v588
    %v590 = vlaneseq
    %v591 = vshrl.u32 %v590, 7
    %v592 = vsub.s32 %v589, %v591
    %v593 = vrot.slane %v577, %v592
    %v595 = vunpack.c.l.s4 1966171168
    %v596 = vunpack.c.0.s8 %v595
    %v597 = vlaneseq
    %v598 = vshrl.u32 %v597, 7
    %v599 = vsub.s32 %v596, %v598
    %v600 = vrot.slane %v578, %v599
    %v602 = vunpack.c.l.s4 1966171168
    %v603 = vunpack.c.0.s8 %v602
    %v604 = vlaneseq
    %v605 = vshrl.u32 %v604, 7
    %v606 = vsub.s32 %v603, %v605
    %v607 = vrot.slane %v579, %v606
    %v608 = vcombine.high %v586, %v586
    %v609 = vcombine.high %v593, %v593
    %v610 = vcombine.high %v600, %v600
    %v611 = vcombine.high %v607, %v607
    %v612 = vcombine.high %v92, %v92
    %v614 = vunpack.c.l.s4 1966171168
    %v615 = vunpack.c.0.s8 %v614
    %v616 = vlaneseq
    %v617 = vshrl.u32 %v616, 7
    %v618 = vsub.s32 %v615, %v617
    %v619 = vrot.slane %v92, %v618
    %v621 = vunpack.c.l.s4 1966171168
    %v622 = vunpack.c.0.s8 %v621
    %v623 = vlaneseq
    %v624 = vshrl.u32 %v623, 7
    %v625 = vsub.s32 %v622, %v624
    %v626 = vrot.slane %v612, %v625
    %v627 = vcombine.high %v619, %v619
    %v628 = vcombine.high %v626, %v626
    %v630 = vunpack.c.l.s4 1966171168
    %v631 = vunpack.c.0.s8 %v630
    %v632 = vlaneseq
    %v633 = vshrl.u32 %v632, 7
    %v634 = vsub.s32 %v631, %v633
    %v635 = vrot.slane %v619, %v634
    %v637 = vunpack.c.l.s4 1966171168
    %v638 = vunpack.c.0.s8 %v637
    %v639 = vlaneseq
    %v640 = vshrl.u32 %v639, 7
    %v641 = vsub.s32 %v638, %v640
    %v642 = vrot.slane %v626, %v641
    %v644 = vunpack.c.l.s4 1966171168
    %v645 = vunpack.c.0.s8 %v644
    %v646 = vlaneseq
    %v647 = vshrl.u32 %v646, 7
    %v648 = vsub.s32 %v645, %v647
    %v649 = vrot.slane %v627, %v648
    %v651 = vunpack.c.l.s4 1966171168
    %v652 = vunpack.c.0.s8 %v651
    %v653 = vlaneseq
    %v654 = vshrl.u32 %v653, 7
    %v655 = vsub.s32 %v652, %v654
    %v656 = vrot.slane %v628, %v655
    %v657 = vcombine.high %v635, %v635
    %v658 = vcombine.high %v642, %v642
    %v659 = vcombine.high %v649, %v649
    %v660 = vcombine.high %v656, %v656
    %v661 = vcombine.high %v93, %v93
    %v663 = vunpack.c.l.s4 1966171168
    %v664 = vunpack.c.0.s8 %v663
    %v665 = vlaneseq
    %v666 = vshrl.u32 %v665, 7
    %v667 = vsub.s32 %v664, %v666
    %v668 = vrot.slane %v93, %v667
    %v670 = vunpack.c.l.s4 1966171168
    %v671 = vunpack.c.0.s8 %v670
    %v672 = vlaneseq
    %v673 = vshrl.u32 %v672, 7
    %v674 = vsub.s32 %v671, %v673
    %v675 = vrot.slane %v661, %v674
    %v676 = vcombine.high %v668, %v668
    %v677 = vcombine.high %v675, %v675
    %v679 = vunpack.c.l.s4 1966171168
    %v680 = vunpack.c.0.s8 %v679
    %v681 = vlaneseq
    %v682 = vshrl.u32 %v681, 7
    %v683 = vsub.s32 %v680, %v682
    %v684 = vrot.slane %v668, %v683
    %v686 = vunpack.c.l.s4 1966171168
    %v687 = vunpack.c.0.s8 %v686
    %v688 = vlaneseq
    %v689 = vshrl.u32 %v688, 7
    %v690 = vsub.s32 %v687, %v689
    %v691 = vrot.slane %v675, %v690
    %v693 = vunpack.c.l.s4 1966171168
    %v694 = vunpack.c.0.s8 %v693
    %v695 = vlaneseq
    %v696 = vshrl.u32 %v695, 7
    %v697 = vsub.s32 %v694, %v696
    %v698 = vrot.slane %v676, %v697
    %v700 = vunpack.c.l.s4 1966171168
    %v701 = vunpack.c.0.s8 %v700
    %v702 = vlaneseq
    %v703 = vshrl.u32 %v702, 7
    %v704 = vsub.s32 %v701, %v703
    %v705 = vrot.slane %v677, %v704
    %v706 = vcombine.high %v684, %v684
    %v707 = vcombine.high %v691, %v691
    %v708 = vcombine.high %v698, %v698
    %v709 = vcombine.high %v705, %v705
    %v710 = vcombine.high %v94, %v94
    %v712 = vunpack.c.l.s4 1966171168
    %v713 = vunpack.c.0.s8 %v712
    %v714 = vlaneseq
    %v715 = vshrl.u32 %v714, 7
    %v716 = vsub.s32 %v713, %v715
    %v717 = vrot.slane %v94, %v716
    %v719 = vunpack.c.l.s4 1966171168
    %v720 = vunpack.c.0.s8 %v719
    %v721 = vlaneseq
    %v722 = vshrl.u32 %v721, 7
    %v723 = vsub.s32 %v720, %v722
    %v724 = vrot.slane %v710, %v723
    %v725 = vcombine.high %v717, %v717
    %v726 = vcombine.high %v724, %v724
    %v728 = vunpack.c.l.s4 1966171168
    %v729 = vunpack.c.0.s8 %v728
    %v730 = vlaneseq
    %v731 = vshrl.u32 %v730, 7
    %v732 = vsub.s32 %v729, %v731
    %v733 = vrot.slane %v717, %v732
    %v735 = vunpack.c.l.s4 1966171168
    %v736 = vunpack.c.0.s8 %v735
    %v737 = vlaneseq
    %v738 = vshrl.u32 %v737, 7
    %v739 = vsub.s32 %v736, %v738
    %v740 = vrot.slane %v724, %v739
    %v742 = vunpack.c.l.s4 1966171168
    %v743 = vunpack.c.0.s8 %v742
    %v744 = vlaneseq
    %v745 = vshrl.u32 %v744, 7
    %v746 = vsub.s32 %v743, %v745
    %v747 = vrot.slane %v725, %v746
    %v749 = vunpack.c.l.s4 1966171168
    %v750 = vunpack.c.0.s8 %v749
    %v751 = vlaneseq
    %v752 = vshrl.u32 %v751, 7
    %v753 = vsub.s32 %v750, %v752
    %v754 = vrot.slane %v726, %v753
    %v755 = vcombine.high %v733, %v733
    %v756 = vcombine.high %v740, %v740
    %v757 = vcombine.high %v747, %v747
    %v758 = vcombine.high %v754, %v754
    %v759 = vlaneseq
    %v760 = vshrl.u32 %v759, 7
    %v761 = vsub.s32 0, %v760
    %v762 = vrot.slane %v390, %v761
    %v763 = vlaneseq
    %v764 = vshrl.u32 %v763, 7
    %v765 = vsub.s32 0, %v764
    %v766 = vrot.slane %v404, %v765
    %v767 = vlaneseq
    %v768 = vshrl.u32 %v767, 7
    %v769 = vsub.s32 0, %v768
    %v770 = vrot.slane %v412, %v769
    %v771 = vlaneseq
    %v772 = vshrl.u32 %v771, 7
    %v773 = vsub.s32 0, %v772
    %v774 = vrot.slane %v414, %v773
    %v775 = vlaneseq
    %v776 = vshrl.u32 %v775, 7
    %v777 = vsub.s32 0, %v776
    %v778 = vrot.slane %v397, %v777
    %v779 = vlaneseq
    %v780 = vshrl.u32 %v779, 7
    %v781 = vsub.s32 0, %v780
    %v782 = vrot.slane %v411, %v781
    %v783 = vlaneseq
    %v784 = vshrl.u32 %v783, 7
    %v785 = vsub.s32 0, %v784
    %v786 = vrot.slane %v413, %v785
    %v787 = vlaneseq
    %v788 = vshrl.u32 %v787, 7
    %v789 = vsub.s32 0, %v788
    %v790 = vrot.slane %v415, %v789
    %v791 = vlaneseq
    %v792 = vshrl.u32 %v791, 7
    %v793 = vsub.s32 0, %v792
    %v794 = vrot.slane %v439, %v793
    %v795 = vlaneseq
    %v796 = vshrl.u32 %v795, 7
    %v797 = vsub.s32 0, %v796
    %v798 = vrot.slane %v453, %v797
    %v799 = vlaneseq
    %v800 = vshrl.u32 %v799, 7
    %v801 = vsub.s32 0, %v800
    %v802 = vrot.slane %v461, %v801
    %v803 = vlaneseq
    %v804 = vshrl.u32 %v803, 7
    %v805 = vsub.s32 0, %v804
    %v806 = vrot.slane %v463, %v805
    %v807 = vlaneseq
    %v808 = vshrl.u32 %v807, 7
    %v809 = vsub.s32 0, %v808
    %v810 = vrot.slane %v446, %v809
    %v811 = vlaneseq
    %v812 = vshrl.u32 %v811, 7
    %v813 = vsub.s32 0, %v812
    %v814 = vrot.slane %v460, %v813
    %v815 = vlaneseq
    %v816 = vshrl.u32 %v815, 7
    %v817 = vsub.s32 0, %v816
    %v818 = vrot.slane %v462, %v817
    %v819 = vlaneseq
    %v820 = vshrl.u32 %v819, 7
    %v821 = vsub.s32 0, %v820
    %v822 = vrot.slane %v464, %v821
    %v823 = vlaneseq
    %v824 = vshrl.u32 %v823, 7
    %v825 = vsub.s32 0, %v824
    %v826 = vrot.slane %v488, %v825
    %v827 = vlaneseq
    %v828 = vshrl.u32 %v827, 7
    %v829 = vsub.s32 0, %v828
    %v830 = vrot.slane %v502, %v829
    %v831 = vlaneseq
    %v832 = vshrl.u32 %v831, 7
    %v833 = vsub.s32 0, %v832
    %v834 = vrot.slane %v510, %v833
    %v835 = vlaneseq
    %v836 = vshrl.u32 %v835, 7
    %v837 = vsub.s32 0, %v836
    %v838 = vrot.slane %v512, %v837
    %v839 = vlaneseq
    %v840 = vshrl.u32 %v839, 7
    %v841 = vsub.s32 0, %v840
    %v842 = vrot.slane %v495, %v841
    %v843 = vlaneseq
    %v844 = vshrl.u32 %v843, 7
    %v845 = vsub.s32 0, %v844
    %v846 = vrot.slane %v509, %v845
    %v847 = vlaneseq
    %v848 = vshrl.u32 %v847, 7
    %v849 = vsub.s32 0, %v848
    %v850 = vrot.slane %v511, %v849
    %v851 = vlaneseq
    %v852 = vshrl.u32 %v851, 7
    %v853 = vsub.s32 0, %v852
    %v854 = vrot.slane %v513, %v853
    %v855 = vlaneseq
    %v856 = vshrl.u32 %v855, 7
    %v857 = vsub.s32 0, %v856
    %v858 = vrot.slane %v537, %v857
    %v859 = vlaneseq
    %v860 = vshrl.u32 %v859, 7
    %v861 = vsub.s32 0, %v860
    %v862 = vrot.slane %v551, %v861
    %v863 = vlaneseq
    %v864 = vshrl.u32 %v863, 7
    %v865 = vsub.s32 0, %v864
    %v866 = vrot.slane %v559, %v865
    %v867 = vlaneseq
    %v868 = vshrl.u32 %v867, 7
    %v869 = vsub.s32 0, %v868
    %v870 = vrot.slane %v561, %v869
    %v871 = vlaneseq
    %v872 = vshrl.u32 %v871, 7
    %v873 = vsub.s32 0, %v872
    %v874 = vrot.slane %v544, %v873
    %v875 = vlaneseq
    %v876 = vshrl.u32 %v875, 7
    %v877 = vsub.s32 0, %v876
    %v878 = vrot.slane %v558, %v877
    %v879 = vlaneseq
    %v880 = vshrl.u32 %v879, 7
    %v881 = vsub.s32 0, %v880
    %v882 = vrot.slane %v560, %v881
    %v883 = vlaneseq
    %v884 = vshrl.u32 %v883, 7
    %v885 = vsub.s32 0, %v884
    %v886 = vrot.slane %v562, %v885
    %v887 = vlaneseq
    %v888 = vshrl.u32 %v887, 7
    %v889 = vsub.s32 0, %v888
    %v890 = vrot.slane %v586, %v889
    %v891 = vlaneseq
    %v892 = vshrl.u32 %v891, 7
    %v893 = vsub.s32 0, %v892
    %v894 = vrot.slane %v600, %v893
    %v895 = vlaneseq
    %v896 = vshrl.u32 %v895, 7
    %v897 = vsub.s32 0, %v896
    %v898 = vrot.slane %v608, %v897
    %v899 = vlaneseq
    %v900 = vshrl.u32 %v899, 7
    %v901 = vsub.s32 0, %v900
    %v902 = vrot.slane %v610, %v901
    %v903 = vlaneseq
    %v904 = vshrl.u32 %v903, 7
    %v905 = vsub.s32 0, %v904
    %v906 = vrot.slane %v593, %v905
    %v907 = vlaneseq
    %v908 = vshrl.u32 %v907, 7
    %v909 = vsub.s32 0, %v908
    %v910 = vrot.slane %v607, %v909
    %v911 = vlaneseq
    %v912 = vshrl.u32 %v911, 7
    %v913 = vsub.s32 0, %v912
    %v914 = vrot.slane %v609, %v913
    %v915 = vlaneseq
    %v916 = vshrl.u32 %v915, 7
    %v917 = vsub.s32 0, %v916
    %v918 = vrot.slane %v611, %v917
    %v919 = vlaneseq
    %v920 = vshrl.u32 %v919, 7
    %v921 = vsub.s32 0, %v920
    %v922 = vrot.slane %v635, %v921
    %v923 = vlaneseq
    %v924 = vshrl.u32 %v923, 7
    %v925 = vsub.s32 0, %v924
    %v926 = vrot.slane %v649, %v925
    %v927 = vlaneseq
    %v928 = vshrl.u32 %v927, 7
    %v929 = vsub.s32 0, %v928
    %v930 = vrot.slane %v657, %v929
    %v931 = vlaneseq
    %v932 = vshrl.u32 %v931, 7
    %v933 = vsub.s32 0, %v932
    %v934 = vrot.slane %v659, %v933
    %v935 = vlaneseq
    %v936 = vshrl.u32 %v935, 7
    %v937 = vsub.s32 0, %v936
    %v938 = vrot.slane %v642, %v937
    %v939 = vlaneseq
    %v940 = vshrl.u32 %v939, 7
    %v941 = vsub.s32 0, %v940
    %v942 = vrot.slane %v656, %v941
    %v943 = vlaneseq
    %v944 = vshrl.u32 %v943, 7
    %v945 = vsub.s32 0, %v944
    %v946 = vrot.slane %v658, %v945
    %v947 = vlaneseq
    %v948 = vshrl.u32 %v947, 7
    %v949 = vsub.s32 0, %v948
    %v950 = vrot.slane %v660, %v949
    %v951 = vlaneseq
    %v952 = vshrl.u32 %v951, 7
    %v953 = vsub.s32 0, %v952
    %v954 = vrot.slane %v684, %v953
    %v955 = vlaneseq
    %v956 = vshrl.u32 %v955, 7
    %v957 = vsub.s32 0, %v956
    %v958 = vrot.slane %v698, %v957
    %v959 = vlaneseq
    %v960 = vshrl.u32 %v959, 7
    %v961 = vsub.s32 0, %v960
    %v962 = vrot.slane %v706, %v961
    %v963 = vlaneseq
    %v964 = vshrl.u32 %v963, 7
    %v965 = vsub.s32 0, %v964
    %v966 = vrot.slane %v708, %v965
    %v967 = vlaneseq
    %v968 = vshrl.u32 %v967, 7
    %v969 = vsub.s32 0, %v968
    %v970 = vrot.slane %v691, %v969
    %v971 = vlaneseq
    %v972 = vshrl.u32 %v971, 7
    %v973 = vsub.s32 0, %v972
    %v974 = vrot.slane %v705, %v973
    %v975 = vlaneseq
    %v976 = vshrl.u32 %v975, 7
    %v977 = vsub.s32 0, %v976
    %v978 = vrot.slane %v707, %v977
    %v979 = vlaneseq
    %v980 = vshrl.u32 %v979, 7
    %v981 = vsub.s32 0, %v980
    %v982 = vrot.slane %v709, %v981
    %v983 = vlaneseq
    %v984 = vshrl.u32 %v983, 7
    %v985 = vsub.s32 0, %v984
    %v986 = vrot.slane %v733, %v985
    %v987 = vlaneseq
    %v988 = vshrl.u32 %v987, 7
    %v989 = vsub.s32 0, %v988
    %v990 = vrot.slane %v747, %v989
    %v991 = vlaneseq
    %v992 = vshrl.u32 %v991, 7
    %v993 = vsub.s32 0, %v992
    %v994 = vrot.slane %v755, %v993
    %v995 = vlaneseq
    %v996 = vshrl.u32 %v995, 7
    %v997 = vsub.s32 0, %v996
    %v998 = vrot.slane %v757, %v997
    %v999 = vlaneseq
    %v1000 = vshrl.u32 %v999, 7
    %v1001 = vsub.s32 0, %v1000
    %v1002 = vrot.slane %v740, %v1001
    %v1003 = vlaneseq
    %v1004 = vshrl.u32 %v1003, 7
    %v1005 = vsub.s32 0, %v1004
    %v1006 = vrot.slane %v754, %v1005
    %v1007 = vlaneseq
    %v1008 = vshrl.u32 %v1007, 7
    %v1009 = vsub.s32 0, %v1008
    %v1010 = vrot.slane %v756, %v1009
    %v1011 = vlaneseq
    %v1012 = vshrl.u32 %v1011, 7
    %v1013 = vsub.s32 0, %v1012
    %v1014 = vrot.slane %v758, %v1013
    %v1079 = vmul.f32 %v762, %v351
    %v1080 = vmul.f32 %v766, %v351
    %v1081 = vmul.f32 %v770, %v351
    %v1082 = vmul.f32 %v774, %v351
    %v1083 = vmul.f32 %v778, %v351
    %v1084 = vmul.f32 %v782, %v351
    %v1085 = vmul.f32 %v786, %v351
    %v1086 = vmul.f32 %v790, %v351
    %v1087 = vmul.f32 %v794, %v352
    %v1088 = vmul.f32 %v798, %v352
    %v1089 = vmul.f32 %v802, %v352
    %v1090 = vmul.f32 %v806, %v352
    %v1091 = vmul.f32 %v810, %v352
    %v1092 = vmul.f32 %v814, %v352
    %v1093 = vmul.f32 %v818, %v352
    %v1094 = vmul.f32 %v822, %v352
    %v1095 = vmul.f32 %v826, %v353
    %v1096 = vmul.f32 %v830, %v353
    %v1097 = vmul.f32 %v834, %v353
    %v1098 = vmul.f32 %v838, %v353
    %v1099 = vmul.f32 %v842, %v353
    %v1100 = vmul.f32 %v846, %v353
    %v1101 = vmul.f32 %v850, %v353
    %v1102 = vmul.f32 %v854, %v353
    %v1103 = vmul.f32 %v858, %v354
    %v1104 = vmul.f32 %v862, %v354
    %v1105 = vmul.f32 %v866, %v354
    %v1106 = vmul.f32 %v870, %v354
    %v1107 = vmul.f32 %v874, %v354
    %v1108 = vmul.f32 %v878, %v354
    %v1109 = vmul.f32 %v882, %v354
    %v1110 = vmul.f32 %v886, %v354
    %v1111 = vmul.f32 %v890, %v355
    %v1112 = vmul.f32 %v894, %v355
    %v1113 = vmul.f32 %v898, %v355
    %v1114 = vmul.f32 %v902, %v355
    %v1115 = vmul.f32 %v906, %v355
    %v1116 = vmul.f32 %v910, %v355
    %v1117 = vmul.f32 %v914, %v355
    %v1118 = vmul.f32 %v918, %v355
    %v1119 = vmul.f32 %v922, %v356
    %v1120 = vmul.f32 %v926, %v356
    %v1121 = vmul.f32 %v930, %v356
    %v1122 = vmul.f32 %v934, %v356
    %v1123 = vmul.f32 %v938, %v356
    %v1124 = vmul.f32 %v942, %v356
    %v1125 = vmul.f32 %v946, %v356
    %v1126 = vmul.f32 %v950, %v356
    %v1127 = vmul.f32 %v954, %v357
    %v1128 = vmul.f32 %v958, %v357
    %v1129 = vmul.f32 %v962, %v357
    %v1130 = vmul.f32 %v966, %v357
    %v1131 = vmul.f32 %v970, %v357
    %v1132 = vmul.f32 %v974, %v357
    %v1133 = vmul.f32 %v978, %v357
    %v1134 = vmul.f32 %v982, %v357
    %v1135 = vmul.f32 %v986, %v358
    %v1136 = vmul.f32 %v990, %v358
    %v1137 = vmul.f32 %v994, %v358
    %v1138 = vmul.f32 %v998, %v358
    %v1139 = vmul.f32 %v1002, %v358
    %v1140 = vmul.f32 %v1006, %v358
    %v1141 = vmul.f32 %v1010, %v358
    %v1142 = vmul.f32 %v1014, %v358
    %v1143 = vsel %vm31, %v1079, 0.0
    %1144 = vadd.xlane.f32.xlu0 %v1143
    %v1145 = vpop.xlane.xlu0 %1144
    %v1146 = vsel %vm31, %v1080, 0.0
    %1147 = vadd.xlane.f32.xlu0 %v1146
    %v1148 = vpop.xlane.xlu0 %1147
    %v1149 = vsel %vm31, %v1081, 0.0
    %1150 = vadd.xlane.f32.xlu0 %v1149
    %v1151 = vpop.xlane.xlu0 %1150
    %v1152 = vsel %vm31, %v1082, 0.0
    %1153 = vadd.xlane.f32.xlu0 %v1152
    %v1154 = vpop.xlane.xlu0 %1153
    %v1155 = vsel %vm31, %v1083, 0.0
    %1156 = vadd.xlane.f32.xlu0 %v1155
    %v1157 = vpop.xlane.xlu0 %1156
    %v1158 = vsel %vm31, %v1084, 0.0
    %1159 = vadd.xlane.f32.xlu0 %v1158
    %v1160 = vpop.xlane.xlu0 %1159
    %v1161 = vsel %vm31, %v1085, 0.0
    %1162 = vadd.xlane.f32.xlu0 %v1161
    %v1163 = vpop.xlane.xlu0 %1162
    %v1164 = vsel %vm31, %v1086, 0.0
    %1165 = vadd.xlane.f32.xlu0 %v1164
    %v1166 = vpop.xlane.xlu0 %1165
    %v1167 = vsel %vm31, %v1087, 0.0
    %1168 = vadd.xlane.f32.xlu0 %v1167
    %v1169 = vpop.xlane.xlu0 %1168
    %v1170 = vsel %vm31, %v1088, 0.0
    %1171 = vadd.xlane.f32.xlu0 %v1170
    %v1172 = vpop.xlane.xlu0 %1171
    %v1173 = vsel %vm31, %v1089, 0.0
    %1174 = vadd.xlane.f32.xlu0 %v1173
    %v1175 = vpop.xlane.xlu0 %1174
    %v1176 = vsel %vm31, %v1090, 0.0
    %1177 = vadd.xlane.f32.xlu0 %v1176
    %v1178 = vpop.xlane.xlu0 %1177
    %v1179 = vsel %vm31, %v1091, 0.0
    %1180 = vadd.xlane.f32.xlu0 %v1179
    %v1181 = vpop.xlane.xlu0 %1180
    %v1182 = vsel %vm31, %v1092, 0.0
    %1183 = vadd.xlane.f32.xlu0 %v1182
    %v1184 = vpop.xlane.xlu0 %1183
    %v1185 = vsel %vm31, %v1093, 0.0
    %1186 = vadd.xlane.f32.xlu0 %v1185
    %v1187 = vpop.xlane.xlu0 %1186
    %v1188 = vsel %vm31, %v1094, 0.0
    %1189 = vadd.xlane.f32.xlu0 %v1188
    %v1190 = vpop.xlane.xlu0 %1189
    %v1191 = vsel %vm31, %v1095, 0.0
    %1192 = vadd.xlane.f32.xlu0 %v1191
    %v1193 = vpop.xlane.xlu0 %1192
    %v1194 = vsel %vm31, %v1096, 0.0
    %1195 = vadd.xlane.f32.xlu0 %v1194
    %v1196 = vpop.xlane.xlu0 %1195
    %v1197 = vsel %vm31, %v1097, 0.0
    %1198 = vadd.xlane.f32.xlu0 %v1197
    %v1199 = vpop.xlane.xlu0 %1198
    %v1200 = vsel %vm31, %v1098, 0.0
    %1201 = vadd.xlane.f32.xlu0 %v1200
    %v1202 = vpop.xlane.xlu0 %1201
    %v1203 = vsel %vm31, %v1099, 0.0
    %1204 = vadd.xlane.f32.xlu0 %v1203
    %v1205 = vpop.xlane.xlu0 %1204
    %v1206 = vsel %vm31, %v1100, 0.0
    %1207 = vadd.xlane.f32.xlu0 %v1206
    %v1208 = vpop.xlane.xlu0 %1207
    %v1209 = vsel %vm31, %v1101, 0.0
    %1210 = vadd.xlane.f32.xlu0 %v1209
    %v1211 = vpop.xlane.xlu0 %1210
    %v1212 = vsel %vm31, %v1102, 0.0
    %1213 = vadd.xlane.f32.xlu0 %v1212
    %v1214 = vpop.xlane.xlu0 %1213
    %v1215 = vsel %vm31, %v1103, 0.0
    %1216 = vadd.xlane.f32.xlu0 %v1215
    %v1217 = vpop.xlane.xlu0 %1216
    %v1218 = vsel %vm31, %v1104, 0.0
    %1219 = vadd.xlane.f32.xlu0 %v1218
    %v1220 = vpop.xlane.xlu0 %1219
    %v1221 = vsel %vm31, %v1105, 0.0
    %1222 = vadd.xlane.f32.xlu0 %v1221
    %v1223 = vpop.xlane.xlu0 %1222
    %v1224 = vsel %vm31, %v1106, 0.0
    %1225 = vadd.xlane.f32.xlu0 %v1224
    %v1226 = vpop.xlane.xlu0 %1225
    %v1227 = vsel %vm31, %v1107, 0.0
    %1228 = vadd.xlane.f32.xlu0 %v1227
    %v1229 = vpop.xlane.xlu0 %1228
    %v1230 = vsel %vm31, %v1108, 0.0
    %1231 = vadd.xlane.f32.xlu0 %v1230
    %v1232 = vpop.xlane.xlu0 %1231
    %v1233 = vsel %vm31, %v1109, 0.0
    %1234 = vadd.xlane.f32.xlu0 %v1233
    %v1235 = vpop.xlane.xlu0 %1234
    %v1236 = vsel %vm31, %v1110, 0.0
    %1237 = vadd.xlane.f32.xlu0 %v1236
    %v1238 = vpop.xlane.xlu0 %1237
    %v1239 = vsel %vm31, %v1111, 0.0
    %1240 = vadd.xlane.f32.xlu0 %v1239
    %v1241 = vpop.xlane.xlu0 %1240
    %v1242 = vsel %vm31, %v1112, 0.0
    %1243 = vadd.xlane.f32.xlu0 %v1242
    %v1244 = vpop.xlane.xlu0 %1243
    %v1245 = vsel %vm31, %v1113, 0.0
    %1246 = vadd.xlane.f32.xlu0 %v1245
    %v1247 = vpop.xlane.xlu0 %1246
    %v1248 = vsel %vm31, %v1114, 0.0
    %1249 = vadd.xlane.f32.xlu0 %v1248
    %v1250 = vpop.xlane.xlu0 %1249
    %v1251 = vsel %vm31, %v1115, 0.0
    %1252 = vadd.xlane.f32.xlu0 %v1251
    %v1253 = vpop.xlane.xlu0 %1252
    %v1254 = vsel %vm31, %v1116, 0.0
    %1255 = vadd.xlane.f32.xlu0 %v1254
    %v1256 = vpop.xlane.xlu0 %1255
    %v1257 = vsel %vm31, %v1117, 0.0
    %1258 = vadd.xlane.f32.xlu0 %v1257
    %v1259 = vpop.xlane.xlu0 %1258
    %v1260 = vsel %vm31, %v1118, 0.0
    %1261 = vadd.xlane.f32.xlu0 %v1260
    %v1262 = vpop.xlane.xlu0 %1261
    %v1263 = vsel %vm31, %v1119, 0.0
    %1264 = vadd.xlane.f32.xlu0 %v1263
    %v1265 = vpop.xlane.xlu0 %1264
    %v1266 = vsel %vm31, %v1120, 0.0
    %1267 = vadd.xlane.f32.xlu0 %v1266
    %v1268 = vpop.xlane.xlu0 %1267
    %v1269 = vsel %vm31, %v1121, 0.0
    %1270 = vadd.xlane.f32.xlu0 %v1269
    %v1271 = vpop.xlane.xlu0 %1270
    %v1272 = vsel %vm31, %v1122, 0.0
    %1273 = vadd.xlane.f32.xlu0 %v1272
    %v1274 = vpop.xlane.xlu0 %1273
    %v1275 = vsel %vm31, %v1123, 0.0
    %1276 = vadd.xlane.f32.xlu0 %v1275
    %v1277 = vpop.xlane.xlu0 %1276
    %v1278 = vsel %vm31, %v1124, 0.0
    %1279 = vadd.xlane.f32.xlu0 %v1278
    %v1280 = vpop.xlane.xlu0 %1279
    %v1281 = vsel %vm31, %v1125, 0.0
    %1282 = vadd.xlane.f32.xlu0 %v1281
    %v1283 = vpop.xlane.xlu0 %1282
    %v1284 = vsel %vm31, %v1126, 0.0
    %1285 = vadd.xlane.f32.xlu0 %v1284
    %v1286 = vpop.xlane.xlu0 %1285
    %v1287 = vsel %vm31, %v1127, 0.0
    %1288 = vadd.xlane.f32.xlu0 %v1287
    %v1289 = vpop.xlane.xlu0 %1288
    %v1290 = vsel %vm31, %v1128, 0.0
    %1291 = vadd.xlane.f32.xlu0 %v1290
    %v1292 = vpop.xlane.xlu0 %1291
    %v1293 = vsel %vm31, %v1129, 0.0
    %1294 = vadd.xlane.f32.xlu0 %v1293
    %v1295 = vpop.xlane.xlu0 %1294
    %v1296 = vsel %vm31, %v1130, 0.0
    %1297 = vadd.xlane.f32.xlu0 %v1296
    %v1298 = vpop.xlane.xlu0 %1297
    %v1299 = vsel %vm31, %v1131, 0.0
    %1300 = vadd.xlane.f32.xlu0 %v1299
    %v1301 = vpop.xlane.xlu0 %1300
    %v1302 = vsel %vm31, %v1132, 0.0
    %1303 = vadd.xlane.f32.xlu0 %v1302
    %v1304 = vpop.xlane.xlu0 %1303
    %v1305 = vsel %vm31, %v1133, 0.0
    %1306 = vadd.xlane.f32.xlu0 %v1305
    %v1307 = vpop.xlane.xlu0 %1306
    %v1308 = vsel %vm31, %v1134, 0.0
    %1309 = vadd.xlane.f32.xlu0 %v1308
    %v1310 = vpop.xlane.xlu0 %1309
    %v1311 = vsel %vm31, %v1135, 0.0
    %1312 = vadd.xlane.f32.xlu0 %v1311
    %v1313 = vpop.xlane.xlu0 %1312
    %v1314 = vsel %vm31, %v1136, 0.0
    %1315 = vadd.xlane.f32.xlu0 %v1314
    %v1316 = vpop.xlane.xlu0 %1315
    %v1317 = vsel %vm31, %v1137, 0.0
    %1318 = vadd.xlane.f32.xlu0 %v1317
    %v1319 = vpop.xlane.xlu0 %1318
    %v1320 = vsel %vm31, %v1138, 0.0
    %1321 = vadd.xlane.f32.xlu0 %v1320
    %v1322 = vpop.xlane.xlu0 %1321
    %v1323 = vsel %vm31, %v1139, 0.0
    %1324 = vadd.xlane.f32.xlu0 %v1323
    %v1325 = vpop.xlane.xlu0 %1324
    %v1326 = vsel %vm31, %v1140, 0.0
    %1327 = vadd.xlane.f32.xlu0 %v1326
    %v1328 = vpop.xlane.xlu0 %1327
    %v1329 = vsel %vm31, %v1141, 0.0
    %1330 = vadd.xlane.f32.xlu0 %v1329
    %v1331 = vpop.xlane.xlu0 %1330
    %v1332 = vsel %vm31, %v1142, 0.0
    %1333 = vadd.xlane.f32.xlu0 %v1332
    %v1334 = vpop.xlane.xlu0 %1333
    %v1399 = vlaneseq
    %v1400 = vand.u32 %v1399, 127
    %v1401 = vlaneseq
    %v1402 = vshrl.u32 %v1401, 7
    %v1403 = vsub.s32 %v1400, %v1402
    %v1404 = vrot.slane %v1145, %v1403
    %v1405 = vlaneseq
    %v1406 = vshrl.u32 %v1405, 7
    %v1407 = vsub.s32 %v1400, %v1406
    %v1408 = vrot.slane %v1148, %v1407
    %v1409 = vlaneseq
    %v1410 = vshrl.u32 %v1409, 7
    %v1411 = vsub.s32 %v1400, %v1410
    %v1412 = vrot.slane %v1151, %v1411
    %v1413 = vlaneseq
    %v1414 = vshrl.u32 %v1413, 7
    %v1415 = vsub.s32 %v1400, %v1414
    %v1416 = vrot.slane %v1154, %v1415
    %v1417 = vlaneseq
    %v1418 = vshrl.u32 %v1417, 7
    %v1419 = vsub.s32 %v1400, %v1418
    %v1420 = vrot.slane %v1157, %v1419
    %v1421 = vlaneseq
    %v1422 = vshrl.u32 %v1421, 7
    %v1423 = vsub.s32 %v1400, %v1422
    %v1424 = vrot.slane %v1160, %v1423
    %v1425 = vlaneseq
    %v1426 = vshrl.u32 %v1425, 7
    %v1427 = vsub.s32 %v1400, %v1426
    %v1428 = vrot.slane %v1163, %v1427
    %v1429 = vlaneseq
    %v1430 = vshrl.u32 %v1429, 7
    %v1431 = vsub.s32 %v1400, %v1430
    %v1432 = vrot.slane %v1166, %v1431
    %v1433 = vlaneseq
    %v1434 = vshrl.u32 %v1433, 7
    %v1435 = vsub.s32 %v1400, %v1434
    %v1436 = vrot.slane %v1169, %v1435
    %v1437 = vlaneseq
    %v1438 = vshrl.u32 %v1437, 7
    %v1439 = vsub.s32 %v1400, %v1438
    %v1440 = vrot.slane %v1172, %v1439
    %v1441 = vlaneseq
    %v1442 = vshrl.u32 %v1441, 7
    %v1443 = vsub.s32 %v1400, %v1442
    %v1444 = vrot.slane %v1175, %v1443
    %v1445 = vlaneseq
    %v1446 = vshrl.u32 %v1445, 7
    %v1447 = vsub.s32 %v1400, %v1446
    %v1448 = vrot.slane %v1178, %v1447
    %v1449 = vlaneseq
    %v1450 = vshrl.u32 %v1449, 7
    %v1451 = vsub.s32 %v1400, %v1450
    %v1452 = vrot.slane %v1181, %v1451
    %v1453 = vlaneseq
    %v1454 = vshrl.u32 %v1453, 7
    %v1455 = vsub.s32 %v1400, %v1454
    %v1456 = vrot.slane %v1184, %v1455
    %v1457 = vlaneseq
    %v1458 = vshrl.u32 %v1457, 7
    %v1459 = vsub.s32 %v1400, %v1458
    %v1460 = vrot.slane %v1187, %v1459
    %v1461 = vlaneseq
    %v1462 = vshrl.u32 %v1461, 7
    %v1463 = vsub.s32 %v1400, %v1462
    %v1464 = vrot.slane %v1190, %v1463
    %v1465 = vlaneseq
    %v1466 = vshrl.u32 %v1465, 7
    %v1467 = vsub.s32 %v1400, %v1466
    %v1468 = vrot.slane %v1193, %v1467
    %v1469 = vlaneseq
    %v1470 = vshrl.u32 %v1469, 7
    %v1471 = vsub.s32 %v1400, %v1470
    %v1472 = vrot.slane %v1196, %v1471
    %v1473 = vlaneseq
    %v1474 = vshrl.u32 %v1473, 7
    %v1475 = vsub.s32 %v1400, %v1474
    %v1476 = vrot.slane %v1199, %v1475
    %v1477 = vlaneseq
    %v1478 = vshrl.u32 %v1477, 7
    %v1479 = vsub.s32 %v1400, %v1478
    %v1480 = vrot.slane %v1202, %v1479
    %v1481 = vlaneseq
    %v1482 = vshrl.u32 %v1481, 7
    %v1483 = vsub.s32 %v1400, %v1482
    %v1484 = vrot.slane %v1205, %v1483
    %v1485 = vlaneseq
    %v1486 = vshrl.u32 %v1485, 7
    %v1487 = vsub.s32 %v1400, %v1486
    %v1488 = vrot.slane %v1208, %v1487
    %v1489 = vlaneseq
    %v1490 = vshrl.u32 %v1489, 7
    %v1491 = vsub.s32 %v1400, %v1490
    %v1492 = vrot.slane %v1211, %v1491
    %v1493 = vlaneseq
    %v1494 = vshrl.u32 %v1493, 7
    %v1495 = vsub.s32 %v1400, %v1494
    %v1496 = vrot.slane %v1214, %v1495
    %v1497 = vlaneseq
    %v1498 = vshrl.u32 %v1497, 7
    %v1499 = vsub.s32 %v1400, %v1498
    %v1500 = vrot.slane %v1217, %v1499
    %v1501 = vlaneseq
    %v1502 = vshrl.u32 %v1501, 7
    %v1503 = vsub.s32 %v1400, %v1502
    %v1504 = vrot.slane %v1220, %v1503
    %v1505 = vlaneseq
    %v1506 = vshrl.u32 %v1505, 7
    %v1507 = vsub.s32 %v1400, %v1506
    %v1508 = vrot.slane %v1223, %v1507
    %v1509 = vlaneseq
    %v1510 = vshrl.u32 %v1509, 7
    %v1511 = vsub.s32 %v1400, %v1510
    %v1512 = vrot.slane %v1226, %v1511
    %v1513 = vlaneseq
    %v1514 = vshrl.u32 %v1513, 7
    %v1515 = vsub.s32 %v1400, %v1514
    %v1516 = vrot.slane %v1229, %v1515
    %v1517 = vlaneseq
    %v1518 = vshrl.u32 %v1517, 7
    %v1519 = vsub.s32 %v1400, %v1518
    %v1520 = vrot.slane %v1232, %v1519
    %v1521 = vlaneseq
    %v1522 = vshrl.u32 %v1521, 7
    %v1523 = vsub.s32 %v1400, %v1522
    %v1524 = vrot.slane %v1235, %v1523
    %v1525 = vlaneseq
    %v1526 = vshrl.u32 %v1525, 7
    %v1527 = vsub.s32 %v1400, %v1526
    %v1528 = vrot.slane %v1238, %v1527
    %v1529 = vlaneseq
    %v1530 = vshrl.u32 %v1529, 7
    %v1531 = vsub.s32 %v1400, %v1530
    %v1532 = vrot.slane %v1241, %v1531
    %v1533 = vlaneseq
    %v1534 = vshrl.u32 %v1533, 7
    %v1535 = vsub.s32 %v1400, %v1534
    %v1536 = vrot.slane %v1244, %v1535
    %v1537 = vlaneseq
    %v1538 = vshrl.u32 %v1537, 7
    %v1539 = vsub.s32 %v1400, %v1538
    %v1540 = vrot.slane %v1247, %v1539
    %v1541 = vlaneseq
    %v1542 = vshrl.u32 %v1541, 7
    %v1543 = vsub.s32 %v1400, %v1542
    %v1544 = vrot.slane %v1250, %v1543
    %v1545 = vlaneseq
    %v1546 = vshrl.u32 %v1545, 7
    %v1547 = vsub.s32 %v1400, %v1546
    %v1548 = vrot.slane %v1253, %v1547
    %v1549 = vlaneseq
    %v1550 = vshrl.u32 %v1549, 7
    %v1551 = vsub.s32 %v1400, %v1550
    %v1552 = vrot.slane %v1256, %v1551
    %v1553 = vlaneseq
    %v1554 = vshrl.u32 %v1553, 7
    %v1555 = vsub.s32 %v1400, %v1554
    %v1556 = vrot.slane %v1259, %v1555
    %v1557 = vlaneseq
    %v1558 = vshrl.u32 %v1557, 7
    %v1559 = vsub.s32 %v1400, %v1558
    %v1560 = vrot.slane %v1262, %v1559
    %v1561 = vlaneseq
    %v1562 = vshrl.u32 %v1561, 7
    %v1563 = vsub.s32 %v1400, %v1562
    %v1564 = vrot.slane %v1265, %v1563
    %v1565 = vlaneseq
    %v1566 = vshrl.u32 %v1565, 7
    %v1567 = vsub.s32 %v1400, %v1566
    %v1568 = vrot.slane %v1268, %v1567
    %v1569 = vlaneseq
    %v1570 = vshrl.u32 %v1569, 7
    %v1571 = vsub.s32 %v1400, %v1570
    %v1572 = vrot.slane %v1271, %v1571
    %v1573 = vlaneseq
    %v1574 = vshrl.u32 %v1573, 7
    %v1575 = vsub.s32 %v1400, %v1574
    %v1576 = vrot.slane %v1274, %v1575
    %v1577 = vlaneseq
    %v1578 = vshrl.u32 %v1577, 7
    %v1579 = vsub.s32 %v1400, %v1578
    %v1580 = vrot.slane %v1277, %v1579
    %v1581 = vlaneseq
    %v1582 = vshrl.u32 %v1581, 7
    %v1583 = vsub.s32 %v1400, %v1582
    %v1584 = vrot.slane %v1280, %v1583
    %v1585 = vlaneseq
    %v1586 = vshrl.u32 %v1585, 7
    %v1587 = vsub.s32 %v1400, %v1586
    %v1588 = vrot.slane %v1283, %v1587
    %v1589 = vlaneseq
    %v1590 = vshrl.u32 %v1589, 7
    %v1591 = vsub.s32 %v1400, %v1590
    %v1592 = vrot.slane %v1286, %v1591
    %v1593 = vlaneseq
    %v1594 = vshrl.u32 %v1593, 7
    %v1595 = vsub.s32 %v1400, %v1594
    %v1596 = vrot.slane %v1289, %v1595
    %v1597 = vlaneseq
    %v1598 = vshrl.u32 %v1597, 7
    %v1599 = vsub.s32 %v1400, %v1598
    %v1600 = vrot.slane %v1292, %v1599
    %v1601 = vlaneseq
    %v1602 = vshrl.u32 %v1601, 7
    %v1603 = vsub.s32 %v1400, %v1602
    %v1604 = vrot.slane %v1295, %v1603
    %v1605 = vlaneseq
    %v1606 = vshrl.u32 %v1605, 7
    %v1607 = vsub.s32 %v1400, %v1606
    %v1608 = vrot.slane %v1298, %v1607
    %v1609 = vlaneseq
    %v1610 = vshrl.u32 %v1609, 7
    %v1611 = vsub.s32 %v1400, %v1610
    %v1612 = vrot.slane %v1301, %v1611
    %v1613 = vlaneseq
    %v1614 = vshrl.u32 %v1613, 7
    %v1615 = vsub.s32 %v1400, %v1614
    %v1616 = vrot.slane %v1304, %v1615
    %v1617 = vlaneseq
    %v1618 = vshrl.u32 %v1617, 7
    %v1619 = vsub.s32 %v1400, %v1618
    %v1620 = vrot.slane %v1307, %v1619
    %v1621 = vlaneseq
    %v1622 = vshrl.u32 %v1621, 7
    %v1623 = vsub.s32 %v1400, %v1622
    %v1624 = vrot.slane %v1310, %v1623
    %v1625 = vlaneseq
    %v1626 = vshrl.u32 %v1625, 7
    %v1627 = vsub.s32 %v1400, %v1626
    %v1628 = vrot.slane %v1313, %v1627
    %v1629 = vlaneseq
    %v1630 = vshrl.u32 %v1629, 7
    %v1631 = vsub.s32 %v1400, %v1630
    %v1632 = vrot.slane %v1316, %v1631
    %v1633 = vlaneseq
    %v1634 = vshrl.u32 %v1633, 7
    %v1635 = vsub.s32 %v1400, %v1634
    %v1636 = vrot.slane %v1319, %v1635
    %v1637 = vlaneseq
    %v1638 = vshrl.u32 %v1637, 7
    %v1639 = vsub.s32 %v1400, %v1638
    %v1640 = vrot.slane %v1322, %v1639
    %v1641 = vlaneseq
    %v1642 = vshrl.u32 %v1641, 7
    %v1643 = vsub.s32 %v1400, %v1642
    %v1644 = vrot.slane %v1325, %v1643
    %v1645 = vlaneseq
    %v1646 = vshrl.u32 %v1645, 7
    %v1647 = vsub.s32 %v1400, %v1646
    %v1648 = vrot.slane %v1328, %v1647
    %v1649 = vlaneseq
    %v1650 = vshrl.u32 %v1649, 7
    %v1651 = vsub.s32 %v1400, %v1650
    %v1652 = vrot.slane %v1331, %v1651
    %v1653 = vlaneseq
    %v1654 = vshrl.u32 %v1653, 7
    %v1655 = vsub.s32 %v1400, %v1654
    %v1656 = vrot.slane %v1334, %v1655
    %vm1657 = vcmask 1041409
    %v1658 = vsel %vm1657, %v1408, %v1404
    %vm1659 = vcmask 1042434
    %v1660 = vsel %vm1659, %v1412, %v1658
    %vm1661 = vcmask 1043459
    %v1662 = vsel %vm1661, %v1416, %v1660
    %vm1663 = vcmask 1044484
    %v1664 = vsel %vm1663, %v1420, %v1662
    %vm1665 = vcmask 1045509
    %v1666 = vsel %vm1665, %v1424, %v1664
    %vm1667 = vcmask 1046534
    %v1668 = vsel %vm1667, %v1428, %v1666
    %vm1669 = vcmask 1047559
    %v1670 = vsel %vm1669, %v1432, %v1668
    %v1671 = vsel %vm1657, %v1440, %v1436
    %v1672 = vsel %vm1659, %v1444, %v1671
    %v1673 = vsel %vm1661, %v1448, %v1672
    %v1674 = vsel %vm1663, %v1452, %v1673
    %v1675 = vsel %vm1665, %v1456, %v1674
    %v1676 = vsel %vm1667, %v1460, %v1675
    %v1677 = vsel %vm1669, %v1464, %v1676
    %v1678 = vsel %vm1657, %v1472, %v1468
    %v1679 = vsel %vm1659, %v1476, %v1678
    %v1680 = vsel %vm1661, %v1480, %v1679
    %v1681 = vsel %vm1663, %v1484, %v1680
    %v1682 = vsel %vm1665, %v1488, %v1681
    %v1683 = vsel %vm1667, %v1492, %v1682
    %v1684 = vsel %vm1669, %v1496, %v1683
    %v1685 = vsel %vm1657, %v1504, %v1500
    %v1686 = vsel %vm1659, %v1508, %v1685
    %v1687 = vsel %vm1661, %v1512, %v1686
    %v1688 = vsel %vm1663, %v1516, %v1687
    %v1689 = vsel %vm1665, %v1520, %v1688
    %v1690 = vsel %vm1667, %v1524, %v1689
    %v1691 = vsel %vm1669, %v1528, %v1690
    %v1692 = vsel %vm1657, %v1536, %v1532
    %v1693 = vsel %vm1659, %v1540, %v1692
    %v1694 = vsel %vm1661, %v1544, %v1693
    %v1695 = vsel %vm1663, %v1548, %v1694
    %v1696 = vsel %vm1665, %v1552, %v1695
    %v1697 = vsel %vm1667, %v1556, %v1696
    %v1698 = vsel %vm1669, %v1560, %v1697
    %v1699 = vsel %vm1657, %v1568, %v1564
    %v1700 = vsel %vm1659, %v1572, %v1699
    %v1701 = vsel %vm1661, %v1576, %v1700
    %v1702 = vsel %vm1663, %v1580, %v1701
    %v1703 = vsel %vm1665, %v1584, %v1702
    %v1704 = vsel %vm1667, %v1588, %v1703
    %v1705 = vsel %vm1669, %v1592, %v1704
    %v1706 = vsel %vm1657, %v1600, %v1596
    %v1707 = vsel %vm1659, %v1604, %v1706
    %v1708 = vsel %vm1661, %v1608, %v1707
    %v1709 = vsel %vm1663, %v1612, %v1708
    %v1710 = vsel %vm1665, %v1616, %v1709
    %v1711 = vsel %vm1667, %v1620, %v1710
    %v1712 = vsel %vm1669, %v1624, %v1711
    %v1713 = vsel %vm1657, %v1632, %v1628
    %v1714 = vsel %vm1659, %v1636, %v1713
    %v1715 = vsel %vm1661, %v1640, %v1714
    %v1716 = vsel %vm1663, %v1644, %v1715
    %v1717 = vsel %vm1665, %v1648, %v1716
    %v1718 = vsel %vm1667, %v1652, %v1717
    %v1719 = vsel %vm1669, %v1656, %v1718
    %v1728 = vsel %vm31, %v1670, -inf
    %1729 = vmax.xlane.f32.xlu0 %v1728
    %v1730 = vpop.xlane.xlu0 %1729
    %v1731 = vsel %vm31, %v1677, -inf
    %1732 = vmax.xlane.f32.xlu0 %v1731
    %v1733 = vpop.xlane.xlu0 %1732
    %v1734 = vsel %vm31, %v1684, -inf
    %1735 = vmax.xlane.f32.xlu0 %v1734
    %v1736 = vpop.xlane.xlu0 %1735
    %v1737 = vsel %vm31, %v1691, -inf
    %1738 = vmax.xlane.f32.xlu0 %v1737
    %v1739 = vpop.xlane.xlu0 %1738
    %v1740 = vsel %vm31, %v1698, -inf
    %1741 = vmax.xlane.f32.xlu0 %v1740
    %v1742 = vpop.xlane.xlu0 %1741
    %v1743 = vsel %vm31, %v1705, -inf
    %1744 = vmax.xlane.f32.xlu0 %v1743
    %v1745 = vpop.xlane.xlu0 %1744
    %v1746 = vsel %vm31, %v1712, -inf
    %1747 = vmax.xlane.f32.xlu0 %v1746
    %v1748 = vpop.xlane.xlu0 %1747
    %v1749 = vsel %vm31, %v1719, -inf
    %1750 = vmax.xlane.f32.xlu0 %v1749
    %v1751 = vpop.xlane.xlu0 %1750
    %v1760 = vlaneseq
    %v1761 = vshrl.u32 %v1760, 7
    %v1762 = vsub.s32 0, %v1761
    %v1763 = vrot.slane %v1730, %v1762
    %v1764 = vlaneseq
    %v1765 = vshrl.u32 %v1764, 7
    %v1766 = vsub.s32 1, %v1765
    %v1767 = vrot.slane %v1730, %v1766
    %v1768 = vlaneseq
    %v1769 = vshrl.u32 %v1768, 7
    %v1770 = vsub.s32 2, %v1769
    %v1771 = vrot.slane %v1730, %v1770
    %v1772 = vlaneseq
    %v1773 = vshrl.u32 %v1772, 7
    %v1774 = vsub.s32 3, %v1773
    %v1775 = vrot.slane %v1730, %v1774
    %v1776 = vlaneseq
    %v1777 = vshrl.u32 %v1776, 7
    %v1778 = vsub.s32 4, %v1777
    %v1779 = vrot.slane %v1730, %v1778
    %v1780 = vlaneseq
    %v1781 = vshrl.u32 %v1780, 7
    %v1782 = vsub.s32 5, %v1781
    %v1783 = vrot.slane %v1730, %v1782
    %v1784 = vlaneseq
    %v1785 = vshrl.u32 %v1784, 7
    %v1786 = vsub.s32 6, %v1785
    %v1787 = vrot.slane %v1730, %v1786
    %v1788 = vlaneseq
    %v1789 = vshrl.u32 %v1788, 7
    %v1790 = vsub.s32 7, %v1789
    %v1791 = vrot.slane %v1730, %v1790
    %v1792 = vlaneseq
    %v1793 = vshrl.u32 %v1792, 7
    %v1794 = vsub.s32 0, %v1793
    %v1795 = vrot.slane %v1733, %v1794
    %v1796 = vlaneseq
    %v1797 = vshrl.u32 %v1796, 7
    %v1798 = vsub.s32 1, %v1797
    %v1799 = vrot.slane %v1733, %v1798
    %v1800 = vlaneseq
    %v1801 = vshrl.u32 %v1800, 7
    %v1802 = vsub.s32 2, %v1801
    %v1803 = vrot.slane %v1733, %v1802
    %v1804 = vlaneseq
    %v1805 = vshrl.u32 %v1804, 7
    %v1806 = vsub.s32 3, %v1805
    %v1807 = vrot.slane %v1733, %v1806
    %v1808 = vlaneseq
    %v1809 = vshrl.u32 %v1808, 7
    %v1810 = vsub.s32 4, %v1809
    %v1811 = vrot.slane %v1733, %v1810
    %v1812 = vlaneseq
    %v1813 = vshrl.u32 %v1812, 7
    %v1814 = vsub.s32 5, %v1813
    %v1815 = vrot.slane %v1733, %v1814
    %v1816 = vlaneseq
    %v1817 = vshrl.u32 %v1816, 7
    %v1818 = vsub.s32 6, %v1817
    %v1819 = vrot.slane %v1733, %v1818
    %v1820 = vlaneseq
    %v1821 = vshrl.u32 %v1820, 7
    %v1822 = vsub.s32 7, %v1821
    %v1823 = vrot.slane %v1733, %v1822
    %v1824 = vlaneseq
    %v1825 = vshrl.u32 %v1824, 7
    %v1826 = vsub.s32 0, %v1825
    %v1827 = vrot.slane %v1736, %v1826
    %v1828 = vlaneseq
    %v1829 = vshrl.u32 %v1828, 7
    %v1830 = vsub.s32 1, %v1829
    %v1831 = vrot.slane %v1736, %v1830
    %v1832 = vlaneseq
    %v1833 = vshrl.u32 %v1832, 7
    %v1834 = vsub.s32 2, %v1833
    %v1835 = vrot.slane %v1736, %v1834
    %v1836 = vlaneseq
    %v1837 = vshrl.u32 %v1836, 7
    %v1838 = vsub.s32 3, %v1837
    %v1839 = vrot.slane %v1736, %v1838
    %v1840 = vlaneseq
    %v1841 = vshrl.u32 %v1840, 7
    %v1842 = vsub.s32 4, %v1841
    %v1843 = vrot.slane %v1736, %v1842
    %v1844 = vlaneseq
    %v1845 = vshrl.u32 %v1844, 7
    %v1846 = vsub.s32 5, %v1845
    %v1847 = vrot.slane %v1736, %v1846
    %v1848 = vlaneseq
    %v1849 = vshrl.u32 %v1848, 7
    %v1850 = vsub.s32 6, %v1849
    %v1851 = vrot.slane %v1736, %v1850
    %v1852 = vlaneseq
    %v1853 = vshrl.u32 %v1852, 7
    %v1854 = vsub.s32 7, %v1853
    %v1855 = vrot.slane %v1736, %v1854
    %v1856 = vlaneseq
    %v1857 = vshrl.u32 %v1856, 7
    %v1858 = vsub.s32 0, %v1857
    %v1859 = vrot.slane %v1739, %v1858
    %v1860 = vlaneseq
    %v1861 = vshrl.u32 %v1860, 7
    %v1862 = vsub.s32 1, %v1861
    %v1863 = vrot.slane %v1739, %v1862
    %v1864 = vlaneseq
    %v1865 = vshrl.u32 %v1864, 7
    %v1866 = vsub.s32 2, %v1865
    %v1867 = vrot.slane %v1739, %v1866
    %v1868 = vlaneseq
    %v1869 = vshrl.u32 %v1868, 7
    %v1870 = vsub.s32 3, %v1869
    %v1871 = vrot.slane %v1739, %v1870
    %v1872 = vlaneseq
    %v1873 = vshrl.u32 %v1872, 7
    %v1874 = vsub.s32 4, %v1873
    %v1875 = vrot.slane %v1739, %v1874
    %v1876 = vlaneseq
    %v1877 = vshrl.u32 %v1876, 7
    %v1878 = vsub.s32 5, %v1877
    %v1879 = vrot.slane %v1739, %v1878
    %v1880 = vlaneseq
    %v1881 = vshrl.u32 %v1880, 7
    %v1882 = vsub.s32 6, %v1881
    %v1883 = vrot.slane %v1739, %v1882
    %v1884 = vlaneseq
    %v1885 = vshrl.u32 %v1884, 7
    %v1886 = vsub.s32 7, %v1885
    %v1887 = vrot.slane %v1739, %v1886
    %v1888 = vlaneseq
    %v1889 = vshrl.u32 %v1888, 7
    %v1890 = vsub.s32 0, %v1889
    %v1891 = vrot.slane %v1742, %v1890
    %v1892 = vlaneseq
    %v1893 = vshrl.u32 %v1892, 7
    %v1894 = vsub.s32 1, %v1893
    %v1895 = vrot.slane %v1742, %v1894
    %v1896 = vlaneseq
    %v1897 = vshrl.u32 %v1896, 7
    %v1898 = vsub.s32 2, %v1897
    %v1899 = vrot.slane %v1742, %v1898
    %v1900 = vlaneseq
    %v1901 = vshrl.u32 %v1900, 7
    %v1902 = vsub.s32 3, %v1901
    %v1903 = vrot.slane %v1742, %v1902
    %v1904 = vlaneseq
    %v1905 = vshrl.u32 %v1904, 7
    %v1906 = vsub.s32 4, %v1905
    %v1907 = vrot.slane %v1742, %v1906
    %v1908 = vlaneseq
    %v1909 = vshrl.u32 %v1908, 7
    %v1910 = vsub.s32 5, %v1909
    %v1911 = vrot.slane %v1742, %v1910
    %v1912 = vlaneseq
    %v1913 = vshrl.u32 %v1912, 7
    %v1914 = vsub.s32 6, %v1913
    %v1915 = vrot.slane %v1742, %v1914
    %v1916 = vlaneseq
    %v1917 = vshrl.u32 %v1916, 7
    %v1918 = vsub.s32 7, %v1917
    %v1919 = vrot.slane %v1742, %v1918
    %v1920 = vlaneseq
    %v1921 = vshrl.u32 %v1920, 7
    %v1922 = vsub.s32 0, %v1921
    %v1923 = vrot.slane %v1745, %v1922
    %v1924 = vlaneseq
    %v1925 = vshrl.u32 %v1924, 7
    %v1926 = vsub.s32 1, %v1925
    %v1927 = vrot.slane %v1745, %v1926
    %v1928 = vlaneseq
    %v1929 = vshrl.u32 %v1928, 7
    %v1930 = vsub.s32 2, %v1929
    %v1931 = vrot.slane %v1745, %v1930
    %v1932 = vlaneseq
    %v1933 = vshrl.u32 %v1932, 7
    %v1934 = vsub.s32 3, %v1933
    %v1935 = vrot.slane %v1745, %v1934
    %v1936 = vlaneseq
    %v1937 = vshrl.u32 %v1936, 7
    %v1938 = vsub.s32 4, %v1937
    %v1939 = vrot.slane %v1745, %v1938
    %v1940 = vlaneseq
    %v1941 = vshrl.u32 %v1940, 7
    %v1942 = vsub.s32 5, %v1941
    %v1943 = vrot.slane %v1745, %v1942
    %v1944 = vlaneseq
    %v1945 = vshrl.u32 %v1944, 7
    %v1946 = vsub.s32 6, %v1945
    %v1947 = vrot.slane %v1745, %v1946
    %v1948 = vlaneseq
    %v1949 = vshrl.u32 %v1948, 7
    %v1950 = vsub.s32 7, %v1949
    %v1951 = vrot.slane %v1745, %v1950
    %v1952 = vlaneseq
    %v1953 = vshrl.u32 %v1952, 7
    %v1954 = vsub.s32 0, %v1953
    %v1955 = vrot.slane %v1748, %v1954
    %v1956 = vlaneseq
    %v1957 = vshrl.u32 %v1956, 7
    %v1958 = vsub.s32 1, %v1957
    %v1959 = vrot.slane %v1748, %v1958
    %v1960 = vlaneseq
    %v1961 = vshrl.u32 %v1960, 7
    %v1962 = vsub.s32 2, %v1961
    %v1963 = vrot.slane %v1748, %v1962
    %v1964 = vlaneseq
    %v1965 = vshrl.u32 %v1964, 7
    %v1966 = vsub.s32 3, %v1965
    %v1967 = vrot.slane %v1748, %v1966
    %v1968 = vlaneseq
    %v1969 = vshrl.u32 %v1968, 7
    %v1970 = vsub.s32 4, %v1969
    %v1971 = vrot.slane %v1748, %v1970
    %v1972 = vlaneseq
    %v1973 = vshrl.u32 %v1972, 7
    %v1974 = vsub.s32 5, %v1973
    %v1975 = vrot.slane %v1748, %v1974
    %v1976 = vlaneseq
    %v1977 = vshrl.u32 %v1976, 7
    %v1978 = vsub.s32 6, %v1977
    %v1979 = vrot.slane %v1748, %v1978
    %v1980 = vlaneseq
    %v1981 = vshrl.u32 %v1980, 7
    %v1982 = vsub.s32 7, %v1981
    %v1983 = vrot.slane %v1748, %v1982
    %v1984 = vlaneseq
    %v1985 = vshrl.u32 %v1984, 7
    %v1986 = vsub.s32 0, %v1985
    %v1987 = vrot.slane %v1751, %v1986
    %v1988 = vlaneseq
    %v1989 = vshrl.u32 %v1988, 7
    %v1990 = vsub.s32 1, %v1989
    %v1991 = vrot.slane %v1751, %v1990
    %v1992 = vlaneseq
    %v1993 = vshrl.u32 %v1992, 7
    %v1994 = vsub.s32 2, %v1993
    %v1995 = vrot.slane %v1751, %v1994
    %v1996 = vlaneseq
    %v1997 = vshrl.u32 %v1996, 7
    %v1998 = vsub.s32 3, %v1997
    %v1999 = vrot.slane %v1751, %v1998
    %v2000 = vlaneseq
    %v2001 = vshrl.u32 %v2000, 7
    %v2002 = vsub.s32 4, %v2001
    %v2003 = vrot.slane %v1751, %v2002
    %v2004 = vlaneseq
    %v2005 = vshrl.u32 %v2004, 7
    %v2006 = vsub.s32 5, %v2005
    %v2007 = vrot.slane %v1751, %v2006
    %v2008 = vlaneseq
    %v2009 = vshrl.u32 %v2008, 7
    %v2010 = vsub.s32 6, %v2009
    %v2011 = vrot.slane %v1751, %v2010
    %v2012 = vlaneseq
    %v2013 = vshrl.u32 %v2012, 7
    %v2014 = vsub.s32 7, %v2013
    %v2015 = vrot.slane %v1751, %v2014
    %vm2080 = vcmp.eq.f32.partialorder %v1145, %v1763
    %vm2081 = vcmp.eq.f32.partialorder %v1148, %v1767
    %vm2082 = vcmp.eq.f32.partialorder %v1151, %v1771
    %vm2083 = vcmp.eq.f32.partialorder %v1154, %v1775
    %vm2084 = vcmp.eq.f32.partialorder %v1157, %v1779
    %vm2085 = vcmp.eq.f32.partialorder %v1160, %v1783
    %vm2086 = vcmp.eq.f32.partialorder %v1163, %v1787
    %vm2087 = vcmp.eq.f32.partialorder %v1166, %v1791
    %vm2088 = vcmp.eq.f32.partialorder %v1169, %v1795
    %vm2089 = vcmp.eq.f32.partialorder %v1172, %v1799
    %vm2090 = vcmp.eq.f32.partialorder %v1175, %v1803
    %vm2091 = vcmp.eq.f32.partialorder %v1178, %v1807
    %vm2092 = vcmp.eq.f32.partialorder %v1181, %v1811
    %vm2093 = vcmp.eq.f32.partialorder %v1184, %v1815
    %vm2094 = vcmp.eq.f32.partialorder %v1187, %v1819
    %vm2095 = vcmp.eq.f32.partialorder %v1190, %v1823
    %vm2096 = vcmp.eq.f32.partialorder %v1193, %v1827
    %vm2097 = vcmp.eq.f32.partialorder %v1196, %v1831
    %vm2098 = vcmp.eq.f32.partialorder %v1199, %v1835
    %vm2099 = vcmp.eq.f32.partialorder %v1202, %v1839
    %vm2100 = vcmp.eq.f32.partialorder %v1205, %v1843
    %vm2101 = vcmp.eq.f32.partialorder %v1208, %v1847
    %vm2102 = vcmp.eq.f32.partialorder %v1211, %v1851
    %vm2103 = vcmp.eq.f32.partialorder %v1214, %v1855
    %vm2104 = vcmp.eq.f32.partialorder %v1217, %v1859
    %vm2105 = vcmp.eq.f32.partialorder %v1220, %v1863
    %vm2106 = vcmp.eq.f32.partialorder %v1223, %v1867
    %vm2107 = vcmp.eq.f32.partialorder %v1226, %v1871
    %vm2108 = vcmp.eq.f32.partialorder %v1229, %v1875
    %vm2109 = vcmp.eq.f32.partialorder %v1232, %v1879
    %vm2110 = vcmp.eq.f32.partialorder %v1235, %v1883
    %vm2111 = vcmp.eq.f32.partialorder %v1238, %v1887
    %vm2112 = vcmp.eq.f32.partialorder %v1241, %v1891
    %vm2113 = vcmp.eq.f32.partialorder %v1244, %v1895
    %vm2114 = vcmp.eq.f32.partialorder %v1247, %v1899
    %vm2115 = vcmp.eq.f32.partialorder %v1250, %v1903
    %vm2116 = vcmp.eq.f32.partialorder %v1253, %v1907
    %vm2117 = vcmp.eq.f32.partialorder %v1256, %v1911
    %vm2118 = vcmp.eq.f32.partialorder %v1259, %v1915
    %vm2119 = vcmp.eq.f32.partialorder %v1262, %v1919
    %vm2120 = vcmp.eq.f32.partialorder %v1265, %v1923
    %vm2121 = vcmp.eq.f32.partialorder %v1268, %v1927
    %vm2122 = vcmp.eq.f32.partialorder %v1271, %v1931
    %vm2123 = vcmp.eq.f32.partialorder %v1274, %v1935
    %vm2124 = vcmp.eq.f32.partialorder %v1277, %v1939
    %vm2125 = vcmp.eq.f32.partialorder %v1280, %v1943
    %vm2126 = vcmp.eq.f32.partialorder %v1283, %v1947
    %vm2127 = vcmp.eq.f32.partialorder %v1286, %v1951
    %vm2128 = vcmp.eq.f32.partialorder %v1289, %v1955
    %vm2129 = vcmp.eq.f32.partialorder %v1292, %v1959
    %vm2130 = vcmp.eq.f32.partialorder %v1295, %v1963
    %vm2131 = vcmp.eq.f32.partialorder %v1298, %v1967
    %vm2132 = vcmp.eq.f32.partialorder %v1301, %v1971
    %vm2133 = vcmp.eq.f32.partialorder %v1304, %v1975
    %vm2134 = vcmp.eq.f32.partialorder %v1307, %v1979
    %vm2135 = vcmp.eq.f32.partialorder %v1310, %v1983
    %vm2136 = vcmp.eq.f32.partialorder %v1313, %v1987
    %vm2137 = vcmp.eq.f32.partialorder %v1316, %v1991
    %vm2138 = vcmp.eq.f32.partialorder %v1319, %v1995
    %vm2139 = vcmp.eq.f32.partialorder %v1322, %v1999
    %vm2140 = vcmp.eq.f32.partialorder %v1325, %v2003
    %vm2141 = vcmp.eq.f32.partialorder %v1328, %v2007
    %vm2142 = vcmp.eq.f32.partialorder %v1331, %v2011
    %vm2143 = vcmp.eq.f32.partialorder %v1334, %v2015
    %2145 = vbcast.lane.b32.xlu0 %v1400, 256
    %v2146 = vpop.permute.xlu0 %2145
    %v2147 = vsel %vm2080, %v2146, 8
    %v2148 = vsel %vm2081, %v2146, 8
    %v2149 = vsel %vm2082, %v2146, 8
    %v2150 = vsel %vm2083, %v2146, 8
    %v2151 = vsel %vm2084, %v2146, 8
    %v2152 = vsel %vm2085, %v2146, 8
    %v2153 = vsel %vm2086, %v2146, 8
    %v2154 = vsel %vm2087, %v2146, 8
    %v2155 = vsel %vm2088, %v2146, 8
    %v2156 = vsel %vm2089, %v2146, 8
    %v2157 = vsel %vm2090, %v2146, 8
    %v2158 = vsel %vm2091, %v2146, 8
    %v2159 = vsel %vm2092, %v2146, 8
    %v2160 = vsel %vm2093, %v2146, 8
    %v2161 = vsel %vm2094, %v2146, 8
    %v2162 = vsel %vm2095, %v2146, 8
    %v2163 = vsel %vm2096, %v2146, 8
    %v2164 = vsel %vm2097, %v2146, 8
    %v2165 = vsel %vm2098, %v2146, 8
    %v2166 = vsel %vm2099, %v2146, 8
    %v2167 = vsel %vm2100, %v2146, 8
    %v2168 = vsel %vm2101, %v2146, 8
    %v2169 = vsel %vm2102, %v2146, 8
    %v2170 = vsel %vm2103, %v2146, 8
    %v2171 = vsel %vm2104, %v2146, 8
    %v2172 = vsel %vm2105, %v2146, 8
    %v2173 = vsel %vm2106, %v2146, 8
    %v2174 = vsel %vm2107, %v2146, 8
    %v2175 = vsel %vm2108, %v2146, 8
    %v2176 = vsel %vm2109, %v2146, 8
    %v2177 = vsel %vm2110, %v2146, 8
    %v2178 = vsel %vm2111, %v2146, 8
    %v2179 = vsel %vm2112, %v2146, 8
    %v2180 = vsel %vm2113, %v2146, 8
    %v2181 = vsel %vm2114, %v2146, 8
    %v2182 = vsel %vm2115, %v2146, 8
    %v2183 = vsel %vm2116, %v2146, 8
    %v2184 = vsel %vm2117, %v2146, 8
    %v2185 = vsel %vm2118, %v2146, 8
    %v2186 = vsel %vm2119, %v2146, 8
    %v2187 = vsel %vm2120, %v2146, 8
    %v2188 = vsel %vm2121, %v2146, 8
    %v2189 = vsel %vm2122, %v2146, 8
    %v2190 = vsel %vm2123, %v2146, 8
    %v2191 = vsel %vm2124, %v2146, 8
    %v2192 = vsel %vm2125, %v2146, 8
    %v2193 = vsel %vm2126, %v2146, 8
    %v2194 = vsel %vm2127, %v2146, 8
    %v2195 = vsel %vm2128, %v2146, 8
    %v2196 = vsel %vm2129, %v2146, 8
    %v2197 = vsel %vm2130, %v2146, 8
    %v2198 = vsel %vm2131, %v2146, 8
    %v2199 = vsel %vm2132, %v2146, 8
    %v2200 = vsel %vm2133, %v2146, 8
    %v2201 = vsel %vm2134, %v2146, 8
    %v2202 = vsel %vm2135, %v2146, 8
    %v2203 = vsel %vm2136, %v2146, 8
    %v2204 = vsel %vm2137, %v2146, 8
    %v2205 = vsel %vm2138, %v2146, 8
    %v2206 = vsel %vm2139, %v2146, 8
    %v2207 = vsel %vm2140, %v2146, 8
    %v2208 = vsel %vm2141, %v2146, 8
    %v2209 = vsel %vm2142, %v2146, 8
    %v2210 = vsel %vm2143, %v2146, 8
    %2211 = vset.pattern.permute.xlu0 0
    %2212 = vperm.xlu0 %2211, %v2147
    %v2213 = vpop.permute.xlu0 %2212
    %2214 = vset.pattern.permute.xlu0 0
    %2215 = vperm.xlu0 %2214, %v2148
    %v2216 = vpop.permute.xlu0 %2215
    %2217 = vset.pattern.permute.xlu0 0
    %2218 = vperm.xlu0 %2217, %v2149
    %v2219 = vpop.permute.xlu0 %2218
    %2220 = vset.pattern.permute.xlu0 0
    %2221 = vperm.xlu0 %2220, %v2150
    %v2222 = vpop.permute.xlu0 %2221
    %2223 = vset.pattern.permute.xlu0 0
    %2224 = vperm.xlu0 %2223, %v2151
    %v2225 = vpop.permute.xlu0 %2224
    %2226 = vset.pattern.permute.xlu0 0
    %2227 = vperm.xlu0 %2226, %v2152
    %v2228 = vpop.permute.xlu0 %2227
    %2229 = vset.pattern.permute.xlu0 0
    %2230 = vperm.xlu0 %2229, %v2153
    %v2231 = vpop.permute.xlu0 %2230
    %2232 = vset.pattern.permute.xlu0 0
    %2233 = vperm.xlu0 %2232, %v2154
    %v2234 = vpop.permute.xlu0 %2233
    %2235 = vset.pattern.permute.xlu0 0
    %2236 = vperm.xlu0 %2235, %v2155
    %v2237 = vpop.permute.xlu0 %2236
    %2238 = vset.pattern.permute.xlu0 0
    %2239 = vperm.xlu0 %2238, %v2156
    %v2240 = vpop.permute.xlu0 %2239
    %2241 = vset.pattern.permute.xlu0 0
    %2242 = vperm.xlu0 %2241, %v2157
    %v2243 = vpop.permute.xlu0 %2242
    %2244 = vset.pattern.permute.xlu0 0
    %2245 = vperm.xlu0 %2244, %v2158
    %v2246 = vpop.permute.xlu0 %2245
    %2247 = vset.pattern.permute.xlu0 0
    %2248 = vperm.xlu0 %2247, %v2159
    %v2249 = vpop.permute.xlu0 %2248
    %2250 = vset.pattern.permute.xlu0 0
    %2251 = vperm.xlu0 %2250, %v2160
    %v2252 = vpop.permute.xlu0 %2251
    %2253 = vset.pattern.permute.xlu0 0
    %2254 = vperm.xlu0 %2253, %v2161
    %v2255 = vpop.permute.xlu0 %2254
    %2256 = vset.pattern.permute.xlu0 0
    %2257 = vperm.xlu0 %2256, %v2162
    %v2258 = vpop.permute.xlu0 %2257
    %2259 = vset.pattern.permute.xlu0 0
    %2260 = vperm.xlu0 %2259, %v2163
    %v2261 = vpop.permute.xlu0 %2260
    %2262 = vset.pattern.permute.xlu0 0
    %2263 = vperm.xlu0 %2262, %v2164
    %v2264 = vpop.permute.xlu0 %2263
    %2265 = vset.pattern.permute.xlu0 0
    %2266 = vperm.xlu0 %2265, %v2165
    %v2267 = vpop.permute.xlu0 %2266
    %2268 = vset.pattern.permute.xlu0 0
    %2269 = vperm.xlu0 %2268, %v2166
    %v2270 = vpop.permute.xlu0 %2269
    %2271 = vset.pattern.permute.xlu0 0
    %2272 = vperm.xlu0 %2271, %v2167
    %v2273 = vpop.permute.xlu0 %2272
    %2274 = vset.pattern.permute.xlu0 0
    %2275 = vperm.xlu0 %2274, %v2168
    %v2276 = vpop.permute.xlu0 %2275
    %2277 = vset.pattern.permute.xlu0 0
    %2278 = vperm.xlu0 %2277, %v2169
    %v2279 = vpop.permute.xlu0 %2278
    %2280 = vset.pattern.permute.xlu0 0
    %2281 = vperm.xlu0 %2280, %v2170
    %v2282 = vpop.permute.xlu0 %2281
    %2283 = vset.pattern.permute.xlu0 0
    %2284 = vperm.xlu0 %2283, %v2171
    %v2285 = vpop.permute.xlu0 %2284
    %2286 = vset.pattern.permute.xlu0 0
    %2287 = vperm.xlu0 %2286, %v2172
    %v2288 = vpop.permute.xlu0 %2287
    %2289 = vset.pattern.permute.xlu0 0
    %2290 = vperm.xlu0 %2289, %v2173
    %v2291 = vpop.permute.xlu0 %2290
    %2292 = vset.pattern.permute.xlu0 0
    %2293 = vperm.xlu0 %2292, %v2174
    %v2294 = vpop.permute.xlu0 %2293
    %2295 = vset.pattern.permute.xlu0 0
    %2296 = vperm.xlu0 %2295, %v2175
    %v2297 = vpop.permute.xlu0 %2296
    %2298 = vset.pattern.permute.xlu0 0
    %2299 = vperm.xlu0 %2298, %v2176
    %v2300 = vpop.permute.xlu0 %2299
    %2301 = vset.pattern.permute.xlu0 0
    %2302 = vperm.xlu0 %2301, %v2177
    %v2303 = vpop.permute.xlu0 %2302
    %2304 = vset.pattern.permute.xlu0 0
    %2305 = vperm.xlu0 %2304, %v2178
    %v2306 = vpop.permute.xlu0 %2305
    %2307 = vset.pattern.permute.xlu0 0
    %2308 = vperm.xlu0 %2307, %v2179
    %v2309 = vpop.permute.xlu0 %2308
    %2310 = vset.pattern.permute.xlu0 0
    %2311 = vperm.xlu0 %2310, %v2180
    %v2312 = vpop.permute.xlu0 %2311
    %2313 = vset.pattern.permute.xlu0 0
    %2314 = vperm.xlu0 %2313, %v2181
    %v2315 = vpop.permute.xlu0 %2314
    %2316 = vset.pattern.permute.xlu0 0
    %2317 = vperm.xlu0 %2316, %v2182
    %v2318 = vpop.permute.xlu0 %2317
    %2319 = vset.pattern.permute.xlu0 0
    %2320 = vperm.xlu0 %2319, %v2183
    %v2321 = vpop.permute.xlu0 %2320
    %2322 = vset.pattern.permute.xlu0 0
    %2323 = vperm.xlu0 %2322, %v2184
    %v2324 = vpop.permute.xlu0 %2323
    %2325 = vset.pattern.permute.xlu0 0
    %2326 = vperm.xlu0 %2325, %v2185
    %v2327 = vpop.permute.xlu0 %2326
    %2328 = vset.pattern.permute.xlu0 0
    %2329 = vperm.xlu0 %2328, %v2186
    %v2330 = vpop.permute.xlu0 %2329
    %2331 = vset.pattern.permute.xlu0 0
    %2332 = vperm.xlu0 %2331, %v2187
    %v2333 = vpop.permute.xlu0 %2332
    %2334 = vset.pattern.permute.xlu0 0
    %2335 = vperm.xlu0 %2334, %v2188
    %v2336 = vpop.permute.xlu0 %2335
    %2337 = vset.pattern.permute.xlu0 0
    %2338 = vperm.xlu0 %2337, %v2189
    %v2339 = vpop.permute.xlu0 %2338
    %2340 = vset.pattern.permute.xlu0 0
    %2341 = vperm.xlu0 %2340, %v2190
    %v2342 = vpop.permute.xlu0 %2341
    %2343 = vset.pattern.permute.xlu0 0
    %2344 = vperm.xlu0 %2343, %v2191
    %v2345 = vpop.permute.xlu0 %2344
    %2346 = vset.pattern.permute.xlu0 0
    %2347 = vperm.xlu0 %2346, %v2192
    %v2348 = vpop.permute.xlu0 %2347
    %2349 = vset.pattern.permute.xlu0 0
    %2350 = vperm.xlu0 %2349, %v2193
    %v2351 = vpop.permute.xlu0 %2350
    %2352 = vset.pattern.permute.xlu0 0
    %2353 = vperm.xlu0 %2352, %v2194
    %v2354 = vpop.permute.xlu0 %2353
    %2355 = vset.pattern.permute.xlu0 0
    %2356 = vperm.xlu0 %2355, %v2195
    %v2357 = vpop.permute.xlu0 %2356
    %2358 = vset.pattern.permute.xlu0 0
    %2359 = vperm.xlu0 %2358, %v2196
    %v2360 = vpop.permute.xlu0 %2359
    %2361 = vset.pattern.permute.xlu0 0
    %2362 = vperm.xlu0 %2361, %v2197
    %v2363 = vpop.permute.xlu0 %2362
    %2364 = vset.pattern.permute.xlu0 0
    %2365 = vperm.xlu0 %2364, %v2198
    %v2366 = vpop.permute.xlu0 %2365
    %2367 = vset.pattern.permute.xlu0 0
    %2368 = vperm.xlu0 %2367, %v2199
    %v2369 = vpop.permute.xlu0 %2368
    %2370 = vset.pattern.permute.xlu0 0
    %2371 = vperm.xlu0 %2370, %v2200
    %v2372 = vpop.permute.xlu0 %2371
    %2373 = vset.pattern.permute.xlu0 0
    %2374 = vperm.xlu0 %2373, %v2201
    %v2375 = vpop.permute.xlu0 %2374
    %2376 = vset.pattern.permute.xlu0 0
    %2377 = vperm.xlu0 %2376, %v2202
    %v2378 = vpop.permute.xlu0 %2377
    %2379 = vset.pattern.permute.xlu0 0
    %2380 = vperm.xlu0 %2379, %v2203
    %v2381 = vpop.permute.xlu0 %2380
    %2382 = vset.pattern.permute.xlu0 0
    %2383 = vperm.xlu0 %2382, %v2204
    %v2384 = vpop.permute.xlu0 %2383
    %2385 = vset.pattern.permute.xlu0 0
    %2386 = vperm.xlu0 %2385, %v2205
    %v2387 = vpop.permute.xlu0 %2386
    %2388 = vset.pattern.permute.xlu0 0
    %2389 = vperm.xlu0 %2388, %v2206
    %v2390 = vpop.permute.xlu0 %2389
    %2391 = vset.pattern.permute.xlu0 0
    %2392 = vperm.xlu0 %2391, %v2207
    %v2393 = vpop.permute.xlu0 %2392
    %2394 = vset.pattern.permute.xlu0 0
    %2395 = vperm.xlu0 %2394, %v2208
    %v2396 = vpop.permute.xlu0 %2395
    %2397 = vset.pattern.permute.xlu0 0
    %2398 = vperm.xlu0 %2397, %v2209
    %v2399 = vpop.permute.xlu0 %2398
    %2400 = vset.pattern.permute.xlu0 0
    %2401 = vperm.xlu0 %2400, %v2210
    %v2402 = vpop.permute.xlu0 %2401
    %v2403 = vlaneseq
    %v2404 = vshrl.u32 %v2403, 7
    %v2405 = vsub.s32 %v1400, %v2404
    %v2406 = vrot.slane %v2213, %v2405
    %v2407 = vlaneseq
    %v2408 = vshrl.u32 %v2407, 7
    %v2409 = vsub.s32 %v1400, %v2408
    %v2410 = vrot.slane %v2216, %v2409
    %v2411 = vlaneseq
    %v2412 = vshrl.u32 %v2411, 7
    %v2413 = vsub.s32 %v1400, %v2412
    %v2414 = vrot.slane %v2219, %v2413
    %v2415 = vlaneseq
    %v2416 = vshrl.u32 %v2415, 7
    %v2417 = vsub.s32 %v1400, %v2416
    %v2418 = vrot.slane %v2222, %v2417
    %v2419 = vlaneseq
    %v2420 = vshrl.u32 %v2419, 7
    %v2421 = vsub.s32 %v1400, %v2420
    %v2422 = vrot.slane %v2225, %v2421
    %v2423 = vlaneseq
    %v2424 = vshrl.u32 %v2423, 7
    %v2425 = vsub.s32 %v1400, %v2424
    %v2426 = vrot.slane %v2228, %v2425
    %v2427 = vlaneseq
    %v2428 = vshrl.u32 %v2427, 7
    %v2429 = vsub.s32 %v1400, %v2428
    %v2430 = vrot.slane %v2231, %v2429
    %v2431 = vlaneseq
    %v2432 = vshrl.u32 %v2431, 7
    %v2433 = vsub.s32 %v1400, %v2432
    %v2434 = vrot.slane %v2234, %v2433
    %v2435 = vlaneseq
    %v2436 = vshrl.u32 %v2435, 7
    %v2437 = vsub.s32 %v1400, %v2436
    %v2438 = vrot.slane %v2237, %v2437
    %v2439 = vlaneseq
    %v2440 = vshrl.u32 %v2439, 7
    %v2441 = vsub.s32 %v1400, %v2440
    %v2442 = vrot.slane %v2240, %v2441
    %v2443 = vlaneseq
    %v2444 = vshrl.u32 %v2443, 7
    %v2445 = vsub.s32 %v1400, %v2444
    %v2446 = vrot.slane %v2243, %v2445
    %v2447 = vlaneseq
    %v2448 = vshrl.u32 %v2447, 7
    %v2449 = vsub.s32 %v1400, %v2448
    %v2450 = vrot.slane %v2246, %v2449
    %v2451 = vlaneseq
    %v2452 = vshrl.u32 %v2451, 7
    %v2453 = vsub.s32 %v1400, %v2452
    %v2454 = vrot.slane %v2249, %v2453
    %v2455 = vlaneseq
    %v2456 = vshrl.u32 %v2455, 7
    %v2457 = vsub.s32 %v1400, %v2456
    %v2458 = vrot.slane %v2252, %v2457
    %v2459 = vlaneseq
    %v2460 = vshrl.u32 %v2459, 7
    %v2461 = vsub.s32 %v1400, %v2460
    %v2462 = vrot.slane %v2255, %v2461
    %v2463 = vlaneseq
    %v2464 = vshrl.u32 %v2463, 7
    %v2465 = vsub.s32 %v1400, %v2464
    %v2466 = vrot.slane %v2258, %v2465
    %v2467 = vlaneseq
    %v2468 = vshrl.u32 %v2467, 7
    %v2469 = vsub.s32 %v1400, %v2468
    %v2470 = vrot.slane %v2261, %v2469
    %v2471 = vlaneseq
    %v2472 = vshrl.u32 %v2471, 7
    %v2473 = vsub.s32 %v1400, %v2472
    %v2474 = vrot.slane %v2264, %v2473
    %v2475 = vlaneseq
    %v2476 = vshrl.u32 %v2475, 7
    %v2477 = vsub.s32 %v1400, %v2476
    %v2478 = vrot.slane %v2267, %v2477
    %v2479 = vlaneseq
    %v2480 = vshrl.u32 %v2479, 7
    %v2481 = vsub.s32 %v1400, %v2480
    %v2482 = vrot.slane %v2270, %v2481
    %v2483 = vlaneseq
    %v2484 = vshrl.u32 %v2483, 7
    %v2485 = vsub.s32 %v1400, %v2484
    %v2486 = vrot.slane %v2273, %v2485
    %v2487 = vlaneseq
    %v2488 = vshrl.u32 %v2487, 7
    %v2489 = vsub.s32 %v1400, %v2488
    %v2490 = vrot.slane %v2276, %v2489
    %v2491 = vlaneseq
    %v2492 = vshrl.u32 %v2491, 7
    %v2493 = vsub.s32 %v1400, %v2492
    %v2494 = vrot.slane %v2279, %v2493
    %v2495 = vlaneseq
    %v2496 = vshrl.u32 %v2495, 7
    %v2497 = vsub.s32 %v1400, %v2496
    %v2498 = vrot.slane %v2282, %v2497
    %v2499 = vlaneseq
    %v2500 = vshrl.u32 %v2499, 7
    %v2501 = vsub.s32 %v1400, %v2500
    %v2502 = vrot.slane %v2285, %v2501
    %v2503 = vlaneseq
    %v2504 = vshrl.u32 %v2503, 7
    %v2505 = vsub.s32 %v1400, %v2504
    %v2506 = vrot.slane %v2288, %v2505
    %v2507 = vlaneseq
    %v2508 = vshrl.u32 %v2507, 7
    %v2509 = vsub.s32 %v1400, %v2508
    %v2510 = vrot.slane %v2291, %v2509
    %v2511 = vlaneseq
    %v2512 = vshrl.u32 %v2511, 7
    %v2513 = vsub.s32 %v1400, %v2512
    %v2514 = vrot.slane %v2294, %v2513
    %v2515 = vlaneseq
    %v2516 = vshrl.u32 %v2515, 7
    %v2517 = vsub.s32 %v1400, %v2516
    %v2518 = vrot.slane %v2297, %v2517
    %v2519 = vlaneseq
    %v2520 = vshrl.u32 %v2519, 7
    %v2521 = vsub.s32 %v1400, %v2520
    %v2522 = vrot.slane %v2300, %v2521
    %v2523 = vlaneseq
    %v2524 = vshrl.u32 %v2523, 7
    %v2525 = vsub.s32 %v1400, %v2524
    %v2526 = vrot.slane %v2303, %v2525
    %v2527 = vlaneseq
    %v2528 = vshrl.u32 %v2527, 7
    %v2529 = vsub.s32 %v1400, %v2528
    %v2530 = vrot.slane %v2306, %v2529
    %v2531 = vlaneseq
    %v2532 = vshrl.u32 %v2531, 7
    %v2533 = vsub.s32 %v1400, %v2532
    %v2534 = vrot.slane %v2309, %v2533
    %v2535 = vlaneseq
    %v2536 = vshrl.u32 %v2535, 7
    %v2537 = vsub.s32 %v1400, %v2536
    %v2538 = vrot.slane %v2312, %v2537
    %v2539 = vlaneseq
    %v2540 = vshrl.u32 %v2539, 7
    %v2541 = vsub.s32 %v1400, %v2540
    %v2542 = vrot.slane %v2315, %v2541
    %v2543 = vlaneseq
    %v2544 = vshrl.u32 %v2543, 7
    %v2545 = vsub.s32 %v1400, %v2544
    %v2546 = vrot.slane %v2318, %v2545
    %v2547 = vlaneseq
    %v2548 = vshrl.u32 %v2547, 7
    %v2549 = vsub.s32 %v1400, %v2548
    %v2550 = vrot.slane %v2321, %v2549
    %v2551 = vlaneseq
    %v2552 = vshrl.u32 %v2551, 7
    %v2553 = vsub.s32 %v1400, %v2552
    %v2554 = vrot.slane %v2324, %v2553
    %v2555 = vlaneseq
    %v2556 = vshrl.u32 %v2555, 7
    %v2557 = vsub.s32 %v1400, %v2556
    %v2558 = vrot.slane %v2327, %v2557
    %v2559 = vlaneseq
    %v2560 = vshrl.u32 %v2559, 7
    %v2561 = vsub.s32 %v1400, %v2560
    %v2562 = vrot.slane %v2330, %v2561
    %v2563 = vlaneseq
    %v2564 = vshrl.u32 %v2563, 7
    %v2565 = vsub.s32 %v1400, %v2564
    %v2566 = vrot.slane %v2333, %v2565
    %v2567 = vlaneseq
    %v2568 = vshrl.u32 %v2567, 7
    %v2569 = vsub.s32 %v1400, %v2568
    %v2570 = vrot.slane %v2336, %v2569
    %v2571 = vlaneseq
    %v2572 = vshrl.u32 %v2571, 7
    %v2573 = vsub.s32 %v1400, %v2572
    %v2574 = vrot.slane %v2339, %v2573
    %v2575 = vlaneseq
    %v2576 = vshrl.u32 %v2575, 7
    %v2577 = vsub.s32 %v1400, %v2576
    %v2578 = vrot.slane %v2342, %v2577
    %v2579 = vlaneseq
    %v2580 = vshrl.u32 %v2579, 7
    %v2581 = vsub.s32 %v1400, %v2580
    %v2582 = vrot.slane %v2345, %v2581
    %v2583 = vlaneseq
    %v2584 = vshrl.u32 %v2583, 7
    %v2585 = vsub.s32 %v1400, %v2584
    %v2586 = vrot.slane %v2348, %v2585
    %v2587 = vlaneseq
    %v2588 = vshrl.u32 %v2587, 7
    %v2589 = vsub.s32 %v1400, %v2588
    %v2590 = vrot.slane %v2351, %v2589
    %v2591 = vlaneseq
    %v2592 = vshrl.u32 %v2591, 7
    %v2593 = vsub.s32 %v1400, %v2592
    %v2594 = vrot.slane %v2354, %v2593
    %v2595 = vlaneseq
    %v2596 = vshrl.u32 %v2595, 7
    %v2597 = vsub.s32 %v1400, %v2596
    %v2598 = vrot.slane %v2357, %v2597
    %v2599 = vlaneseq
    %v2600 = vshrl.u32 %v2599, 7
    %v2601 = vsub.s32 %v1400, %v2600
    %v2602 = vrot.slane %v2360, %v2601
    %v2603 = vlaneseq
    %v2604 = vshrl.u32 %v2603, 7
    %v2605 = vsub.s32 %v1400, %v2604
    %v2606 = vrot.slane %v2363, %v2605
    %v2607 = vlaneseq
    %v2608 = vshrl.u32 %v2607, 7
    %v2609 = vsub.s32 %v1400, %v2608
    %v2610 = vrot.slane %v2366, %v2609
    %v2611 = vlaneseq
    %v2612 = vshrl.u32 %v2611, 7
    %v2613 = vsub.s32 %v1400, %v2612
    %v2614 = vrot.slane %v2369, %v2613
    %v2615 = vlaneseq
    %v2616 = vshrl.u32 %v2615, 7
    %v2617 = vsub.s32 %v1400, %v2616
    %v2618 = vrot.slane %v2372, %v2617
    %v2619 = vlaneseq
    %v2620 = vshrl.u32 %v2619, 7
    %v2621 = vsub.s32 %v1400, %v2620
    %v2622 = vrot.slane %v2375, %v2621
    %v2623 = vlaneseq
    %v2624 = vshrl.u32 %v2623, 7
    %v2625 = vsub.s32 %v1400, %v2624
    %v2626 = vrot.slane %v2378, %v2625
    %v2627 = vlaneseq
    %v2628 = vshrl.u32 %v2627, 7
    %v2629 = vsub.s32 %v1400, %v2628
    %v2630 = vrot.slane %v2381, %v2629
    %v2631 = vlaneseq
    %v2632 = vshrl.u32 %v2631, 7
    %v2633 = vsub.s32 %v1400, %v2632
    %v2634 = vrot.slane %v2384, %v2633
    %v2635 = vlaneseq
    %v2636 = vshrl.u32 %v2635, 7
    %v2637 = vsub.s32 %v1400, %v2636
    %v2638 = vrot.slane %v2387, %v2637
    %v2639 = vlaneseq
    %v2640 = vshrl.u32 %v2639, 7
    %v2641 = vsub.s32 %v1400, %v2640
    %v2642 = vrot.slane %v2390, %v2641
    %v2643 = vlaneseq
    %v2644 = vshrl.u32 %v2643, 7
    %v2645 = vsub.s32 %v1400, %v2644
    %v2646 = vrot.slane %v2393, %v2645
    %v2647 = vlaneseq
    %v2648 = vshrl.u32 %v2647, 7
    %v2649 = vsub.s32 %v1400, %v2648
    %v2650 = vrot.slane %v2396, %v2649
    %v2651 = vlaneseq
    %v2652 = vshrl.u32 %v2651, 7
    %v2653 = vsub.s32 %v1400, %v2652
    %v2654 = vrot.slane %v2399, %v2653
    %v2655 = vlaneseq
    %v2656 = vshrl.u32 %v2655, 7
    %v2657 = vsub.s32 %v1400, %v2656
    %v2658 = vrot.slane %v2402, %v2657
    %v2659 = vsel %vm1657, %v2410, %v2406
    %v2660 = vsel %vm1659, %v2414, %v2659
    %v2661 = vsel %vm1661, %v2418, %v2660
    %v2662 = vsel %vm1663, %v2422, %v2661
    %v2663 = vsel %vm1665, %v2426, %v2662
    %v2664 = vsel %vm1667, %v2430, %v2663
    %v2665 = vsel %vm1669, %v2434, %v2664
    %v2666 = vsel %vm1657, %v2442, %v2438
    %v2667 = vsel %vm1659, %v2446, %v2666
    %v2668 = vsel %vm1661, %v2450, %v2667
    %v2669 = vsel %vm1663, %v2454, %v2668
    %v2670 = vsel %vm1665, %v2458, %v2669
    %v2671 = vsel %vm1667, %v2462, %v2670
    %v2672 = vsel %vm1669, %v2466, %v2671
    %v2673 = vsel %vm1657, %v2474, %v2470
    %v2674 = vsel %vm1659, %v2478, %v2673
    %v2675 = vsel %vm1661, %v2482, %v2674
    %v2676 = vsel %vm1663, %v2486, %v2675
    %v2677 = vsel %vm1665, %v2490, %v2676
    %v2678 = vsel %vm1667, %v2494, %v2677
    %v2679 = vsel %vm1669, %v2498, %v2678
    %v2680 = vsel %vm1657, %v2506, %v2502
    %v2681 = vsel %vm1659, %v2510, %v2680
    %v2682 = vsel %vm1661, %v2514, %v2681
    %v2683 = vsel %vm1663, %v2518, %v2682
    %v2684 = vsel %vm1665, %v2522, %v2683
    %v2685 = vsel %vm1667, %v2526, %v2684
    %v2686 = vsel %vm1669, %v2530, %v2685
    %v2687 = vsel %vm1657, %v2538, %v2534
    %v2688 = vsel %vm1659, %v2542, %v2687
    %v2689 = vsel %vm1661, %v2546, %v2688
    %v2690 = vsel %vm1663, %v2550, %v2689
    %v2691 = vsel %vm1665, %v2554, %v2690
    %v2692 = vsel %vm1667, %v2558, %v2691
    %v2693 = vsel %vm1669, %v2562, %v2692
    %v2694 = vsel %vm1657, %v2570, %v2566
    %v2695 = vsel %vm1659, %v2574, %v2694
    %v2696 = vsel %vm1661, %v2578, %v2695
    %v2697 = vsel %vm1663, %v2582, %v2696
    %v2698 = vsel %vm1665, %v2586, %v2697
    %v2699 = vsel %vm1667, %v2590, %v2698
    %v2700 = vsel %vm1669, %v2594, %v2699
    %v2701 = vsel %vm1657, %v2602, %v2598
    %v2702 = vsel %vm1659, %v2606, %v2701
    %v2703 = vsel %vm1661, %v2610, %v2702
    %v2704 = vsel %vm1663, %v2614, %v2703
    %v2705 = vsel %vm1665, %v2618, %v2704
    %v2706 = vsel %vm1667, %v2622, %v2705
    %v2707 = vsel %vm1669, %v2626, %v2706
    %v2708 = vsel %vm1657, %v2634, %v2630
    %v2709 = vsel %vm1659, %v2638, %v2708
    %v2710 = vsel %vm1661, %v2642, %v2709
    %v2711 = vsel %vm1663, %v2646, %v2710
    %v2712 = vsel %vm1665, %v2650, %v2711
    %v2713 = vsel %vm1667, %v2654, %v2712
    %v2714 = vsel %vm1669, %v2658, %v2713
    %v2715 = vsel %vm31, %v2665, 2147483647
    %v2716 = vand.u32 %v2715, 65535
    %v2717 = vshra.s32 %v2715, 16
    %v2718 = vcvt.s32.f32 %v2716
    %v2719 = vcvt.s32.f32 %v2717
    %2720 = vmin.xlane.f32.xlu0 %v2719
    %v2721 = vpop.xlane.xlu0 %2720
    %vm2722 = vcmp.eq.f32.partialorder %v2719, %v2721
    %v2723 = vsel %vm2722, %v2718, inf
    %2724 = vmin.xlane.f32.xlu0 %v2723
    %v2725 = vpop.xlane.xlu0 %2724
    %v2726 = vcvt.f32.s32 %v2725
    %v2727 = vcvt.f32.s32 %v2721
    %v2728 = vshll.u32 %v2727, 16
    %v2729 = vadd.s32 %v2728, %v2726
    %v2730 = vsel %vm31, %v2672, 2147483647
    %v2731 = vand.u32 %v2730, 65535
    %v2732 = vshra.s32 %v2730, 16
    %v2733 = vcvt.s32.f32 %v2731
    %v2734 = vcvt.s32.f32 %v2732
    %2735 = vmin.xlane.f32.xlu0 %v2734
    %v2736 = vpop.xlane.xlu0 %2735
    %vm2737 = vcmp.eq.f32.partialorder %v2734, %v2736
    %v2738 = vsel %vm2737, %v2733, inf
    %2739 = vmin.xlane.f32.xlu0 %v2738
    %v2740 = vpop.xlane.xlu0 %2739
    %v2741 = vcvt.f32.s32 %v2740
    %v2742 = vcvt.f32.s32 %v2736
    %v2743 = vshll.u32 %v2742, 16
    %v2744 = vadd.s32 %v2743, %v2741
    %v2745 = vsel %vm31, %v2679, 2147483647
    %v2746 = vand.u32 %v2745, 65535
    %v2747 = vshra.s32 %v2745, 16
    %v2748 = vcvt.s32.f32 %v2746
    %v2749 = vcvt.s32.f32 %v2747
    %2750 = vmin.xlane.f32.xlu0 %v2749
    %v2751 = vpop.xlane.xlu0 %2750
    %vm2752 = vcmp.eq.f32.partialorder %v2749, %v2751
    %v2753 = vsel %vm2752, %v2748, inf
    %2754 = vmin.xlane.f32.xlu0 %v2753
    %v2755 = vpop.xlane.xlu0 %2754
    %v2756 = vcvt.f32.s32 %v2755
    %v2757 = vcvt.f32.s32 %v2751
    %v2758 = vshll.u32 %v2757, 16
    %v2759 = vadd.s32 %v2758, %v2756
    %v2760 = vsel %vm31, %v2686, 2147483647
    %v2761 = vand.u32 %v2760, 65535
    %v2762 = vshra.s32 %v2760, 16
    %v2763 = vcvt.s32.f32 %v2761
    %v2764 = vcvt.s32.f32 %v2762
    %2765 = vmin.xlane.f32.xlu0 %v2764
    %v2766 = vpop.xlane.xlu0 %2765
    %vm2767 = vcmp.eq.f32.partialorder %v2764, %v2766
    %v2768 = vsel %vm2767, %v2763, inf
    %2769 = vmin.xlane.f32.xlu0 %v2768
    %v2770 = vpop.xlane.xlu0 %2769
    %v2771 = vcvt.f32.s32 %v2770
    %v2772 = vcvt.f32.s32 %v2766
    %v2773 = vshll.u32 %v2772, 16
    %v2774 = vadd.s32 %v2773, %v2771
    %v2775 = vsel %vm31, %v2693, 2147483647
    %v2776 = vand.u32 %v2775, 65535
    %v2777 = vshra.s32 %v2775, 16
    %v2778 = vcvt.s32.f32 %v2776
    %v2779 = vcvt.s32.f32 %v2777
    %2780 = vmin.xlane.f32.xlu0 %v2779
    %v2781 = vpop.xlane.xlu0 %2780
    %vm2782 = vcmp.eq.f32.partialorder %v2779, %v2781
    %v2783 = vsel %vm2782, %v2778, inf
    %2784 = vmin.xlane.f32.xlu0 %v2783
    %v2785 = vpop.xlane.xlu0 %2784
    %v2786 = vcvt.f32.s32 %v2785
    %v2787 = vcvt.f32.s32 %v2781
    %v2788 = vshll.u32 %v2787, 16
    %v2789 = vadd.s32 %v2788, %v2786
    %v2790 = vsel %vm31, %v2700, 2147483647
    %v2791 = vand.u32 %v2790, 65535
    %v2792 = vshra.s32 %v2790, 16
    %v2793 = vcvt.s32.f32 %v2791
    %v2794 = vcvt.s32.f32 %v2792
    %2795 = vmin.xlane.f32.xlu0 %v2794
    %v2796 = vpop.xlane.xlu0 %2795
    %vm2797 = vcmp.eq.f32.partialorder %v2794, %v2796
    %v2798 = vsel %vm2797, %v2793, inf
    %2799 = vmin.xlane.f32.xlu0 %v2798
    %v2800 = vpop.xlane.xlu0 %2799
    %v2801 = vcvt.f32.s32 %v2800
    %v2802 = vcvt.f32.s32 %v2796
    %v2803 = vshll.u32 %v2802, 16
    %v2804 = vadd.s32 %v2803, %v2801
    %v2805 = vsel %vm31, %v2707, 2147483647
    %v2806 = vand.u32 %v2805, 65535
    %v2807 = vshra.s32 %v2805, 16
    %v2808 = vcvt.s32.f32 %v2806
    %v2809 = vcvt.s32.f32 %v2807
    %2810 = vmin.xlane.f32.xlu0 %v2809
    %v2811 = vpop.xlane.xlu0 %2810
    %vm2812 = vcmp.eq.f32.partialorder %v2809, %v2811
    %v2813 = vsel %vm2812, %v2808, inf
    %2814 = vmin.xlane.f32.xlu0 %v2813
    %v2815 = vpop.xlane.xlu0 %2814
    %v2816 = vcvt.f32.s32 %v2815
    %v2817 = vcvt.f32.s32 %v2811
    %v2818 = vshll.u32 %v2817, 16
    %v2819 = vadd.s32 %v2818, %v2816
    %v2820 = vsel %vm31, %v2714, 2147483647
    %v2821 = vand.u32 %v2820, 65535
    %v2822 = vshra.s32 %v2820, 16
    %v2823 = vcvt.s32.f32 %v2821
    %v2824 = vcvt.s32.f32 %v2822
    %2825 = vmin.xlane.f32.xlu0 %v2824
    %v2826 = vpop.xlane.xlu0 %2825
    %vm2827 = vcmp.eq.f32.partialorder %v2824, %v2826
    %v2828 = vsel %vm2827, %v2823, inf
    %2829 = vmin.xlane.f32.xlu0 %v2828
    %v2830 = vpop.xlane.xlu0 %2829
    %v2831 = vcvt.f32.s32 %v2830
    %v2832 = vcvt.f32.s32 %v2826
    %v2833 = vshll.u32 %v2832, 16
    %v2834 = vadd.s32 %v2833, %v2831
    %v2835 = vcvt.s32.f32 %v2729
    %v2836 = vcvt.s32.f32 %v2744
    %v2837 = vcvt.s32.f32 %v2759
    %v2838 = vcvt.s32.f32 %v2774
    %v2839 = vcvt.s32.f32 %v2789
    %v2840 = vcvt.s32.f32 %v2804
    %v2841 = vcvt.s32.f32 %v2819
    %v2842 = vcvt.s32.f32 %v2834
    %v2851 = vlaneseq
    %v2852 = vshrl.u32 %v2851, 7
    %v2853 = vsub.s32 0, %v2852
    %v2854 = vrot.slane %v23, %v2853
    %2856 = vbcast.lane.b32.xlu0 %v2854, 256
    %v2857 = vpop.permute.xlu0 %2856
    %v2858 = vlaneseq
    %v2859 = vshrl.u32 %v2858, 7
    %v2860 = vsub.s32 1, %v2859
    %v2861 = vrot.slane %v23, %v2860
    %2863 = vbcast.lane.b32.xlu0 %v2861, 256
    %v2864 = vpop.permute.xlu0 %2863
    %v2865 = vlaneseq
    %v2866 = vshrl.u32 %v2865, 7
    %v2867 = vsub.s32 2, %v2866
    %v2868 = vrot.slane %v23, %v2867
    %2870 = vbcast.lane.b32.xlu0 %v2868, 256
    %v2871 = vpop.permute.xlu0 %2870
    %v2872 = vlaneseq
    %v2873 = vshrl.u32 %v2872, 7
    %v2874 = vsub.s32 3, %v2873
    %v2875 = vrot.slane %v23, %v2874
    %2877 = vbcast.lane.b32.xlu0 %v2875, 256
    %v2878 = vpop.permute.xlu0 %2877
    %v2879 = vlaneseq
    %v2880 = vshrl.u32 %v2879, 7
    %v2881 = vsub.s32 4, %v2880
    %v2882 = vrot.slane %v23, %v2881
    %2884 = vbcast.lane.b32.xlu0 %v2882, 256
    %v2885 = vpop.permute.xlu0 %2884
    %v2886 = vlaneseq
    %v2887 = vshrl.u32 %v2886, 7
    %v2888 = vsub.s32 5, %v2887
    %v2889 = vrot.slane %v23, %v2888
    %2891 = vbcast.lane.b32.xlu0 %v2889, 256
    %v2892 = vpop.permute.xlu0 %2891
    %v2893 = vlaneseq
    %v2894 = vshrl.u32 %v2893, 7
    %v2895 = vsub.s32 6, %v2894
    %v2896 = vrot.slane %v23, %v2895
    %2898 = vbcast.lane.b32.xlu0 %v2896, 256
    %v2899 = vpop.permute.xlu0 %2898
    %v2900 = vlaneseq
    %v2901 = vshrl.u32 %v2900, 7
    %v2902 = vsub.s32 7, %v2901
    %v2903 = vrot.slane %v23, %v2902
    %2905 = vbcast.lane.b32.xlu0 %v2903, 256
    %v2906 = vpop.permute.xlu0 %2905
    %v2907 = vlaneseq
    %v2908 = vshrl.u32 %v2907, 7
    %v2909 = vsub.s32 0, %v2908
    %v2910 = vrot.slane %v24, %v2909
    %2912 = vbcast.lane.b32.xlu0 %v2910, 256
    %v2913 = vpop.permute.xlu0 %2912
    %v2914 = vlaneseq
    %v2915 = vshrl.u32 %v2914, 7
    %v2916 = vsub.s32 1, %v2915
    %v2917 = vrot.slane %v24, %v2916
    %2919 = vbcast.lane.b32.xlu0 %v2917, 256
    %v2920 = vpop.permute.xlu0 %2919
    %v2921 = vlaneseq
    %v2922 = vshrl.u32 %v2921, 7
    %v2923 = vsub.s32 2, %v2922
    %v2924 = vrot.slane %v24, %v2923
    %2926 = vbcast.lane.b32.xlu0 %v2924, 256
    %v2927 = vpop.permute.xlu0 %2926
    %v2928 = vlaneseq
    %v2929 = vshrl.u32 %v2928, 7
    %v2930 = vsub.s32 3, %v2929
    %v2931 = vrot.slane %v24, %v2930
    %2933 = vbcast.lane.b32.xlu0 %v2931, 256
    %v2934 = vpop.permute.xlu0 %2933
    %v2935 = vlaneseq
    %v2936 = vshrl.u32 %v2935, 7
    %v2937 = vsub.s32 4, %v2936
    %v2938 = vrot.slane %v24, %v2937
    %2940 = vbcast.lane.b32.xlu0 %v2938, 256
    %v2941 = vpop.permute.xlu0 %2940
    %v2942 = vlaneseq
    %v2943 = vshrl.u32 %v2942, 7
    %v2944 = vsub.s32 5, %v2943
    %v2945 = vrot.slane %v24, %v2944
    %2947 = vbcast.lane.b32.xlu0 %v2945, 256
    %v2948 = vpop.permute.xlu0 %2947
    %v2949 = vlaneseq
    %v2950 = vshrl.u32 %v2949, 7
    %v2951 = vsub.s32 6, %v2950
    %v2952 = vrot.slane %v24, %v2951
    %2954 = vbcast.lane.b32.xlu0 %v2952, 256
    %v2955 = vpop.permute.xlu0 %2954
    %v2956 = vlaneseq
    %v2957 = vshrl.u32 %v2956, 7
    %v2958 = vsub.s32 7, %v2957
    %v2959 = vrot.slane %v24, %v2958
    %2961 = vbcast.lane.b32.xlu0 %v2959, 256
    %v2962 = vpop.permute.xlu0 %2961
    %v2963 = vlaneseq
    %v2964 = vshrl.u32 %v2963, 7
    %v2965 = vsub.s32 0, %v2964
    %v2966 = vrot.slane %v25, %v2965
    %2968 = vbcast.lane.b32.xlu0 %v2966, 256
    %v2969 = vpop.permute.xlu0 %2968
    %v2970 = vlaneseq
    %v2971 = vshrl.u32 %v2970, 7
    %v2972 = vsub.s32 1, %v2971
    %v2973 = vrot.slane %v25, %v2972
    %2975 = vbcast.lane.b32.xlu0 %v2973, 256
    %v2976 = vpop.permute.xlu0 %2975
    %v2977 = vlaneseq
    %v2978 = vshrl.u32 %v2977, 7
    %v2979 = vsub.s32 2, %v2978
    %v2980 = vrot.slane %v25, %v2979
    %2982 = vbcast.lane.b32.xlu0 %v2980, 256
    %v2983 = vpop.permute.xlu0 %2982
    %v2984 = vlaneseq
    %v2985 = vshrl.u32 %v2984, 7
    %v2986 = vsub.s32 3, %v2985
    %v2987 = vrot.slane %v25, %v2986
    %2989 = vbcast.lane.b32.xlu0 %v2987, 256
    %v2990 = vpop.permute.xlu0 %2989
    %v2991 = vlaneseq
    %v2992 = vshrl.u32 %v2991, 7
    %v2993 = vsub.s32 4, %v2992
    %v2994 = vrot.slane %v25, %v2993
    %2996 = vbcast.lane.b32.xlu0 %v2994, 256
    %v2997 = vpop.permute.xlu0 %2996
    %v2998 = vlaneseq
    %v2999 = vshrl.u32 %v2998, 7
    %v3000 = vsub.s32 5, %v2999
    %v3001 = vrot.slane %v25, %v3000
    %3003 = vbcast.lane.b32.xlu0 %v3001, 256
    %v3004 = vpop.permute.xlu0 %3003
    %v3005 = vlaneseq
    %v3006 = vshrl.u32 %v3005, 7
    %v3007 = vsub.s32 6, %v3006
    %v3008 = vrot.slane %v25, %v3007
    %3010 = vbcast.lane.b32.xlu0 %v3008, 256
    %v3011 = vpop.permute.xlu0 %3010
    %v3012 = vlaneseq
    %v3013 = vshrl.u32 %v3012, 7
    %v3014 = vsub.s32 7, %v3013
    %v3015 = vrot.slane %v25, %v3014
    %3017 = vbcast.lane.b32.xlu0 %v3015, 256
    %v3018 = vpop.permute.xlu0 %3017
    %v3019 = vlaneseq
    %v3020 = vshrl.u32 %v3019, 7
    %v3021 = vsub.s32 0, %v3020
    %v3022 = vrot.slane %v26, %v3021
    %3024 = vbcast.lane.b32.xlu0 %v3022, 256
    %v3025 = vpop.permute.xlu0 %3024
    %v3026 = vlaneseq
    %v3027 = vshrl.u32 %v3026, 7
    %v3028 = vsub.s32 1, %v3027
    %v3029 = vrot.slane %v26, %v3028
    %3031 = vbcast.lane.b32.xlu0 %v3029, 256
    %v3032 = vpop.permute.xlu0 %3031
    %v3033 = vlaneseq
    %v3034 = vshrl.u32 %v3033, 7
    %v3035 = vsub.s32 2, %v3034
    %v3036 = vrot.slane %v26, %v3035
    %3038 = vbcast.lane.b32.xlu0 %v3036, 256
    %v3039 = vpop.permute.xlu0 %3038
    %v3040 = vlaneseq
    %v3041 = vshrl.u32 %v3040, 7
    %v3042 = vsub.s32 3, %v3041
    %v3043 = vrot.slane %v26, %v3042
    %3045 = vbcast.lane.b32.xlu0 %v3043, 256
    %v3046 = vpop.permute.xlu0 %3045
    %v3047 = vlaneseq
    %v3048 = vshrl.u32 %v3047, 7
    %v3049 = vsub.s32 4, %v3048
    %v3050 = vrot.slane %v26, %v3049
    %3052 = vbcast.lane.b32.xlu0 %v3050, 256
    %v3053 = vpop.permute.xlu0 %3052
    %v3054 = vlaneseq
    %v3055 = vshrl.u32 %v3054, 7
    %v3056 = vsub.s32 5, %v3055
    %v3057 = vrot.slane %v26, %v3056
    %3059 = vbcast.lane.b32.xlu0 %v3057, 256
    %v3060 = vpop.permute.xlu0 %3059
    %v3061 = vlaneseq
    %v3062 = vshrl.u32 %v3061, 7
    %v3063 = vsub.s32 6, %v3062
    %v3064 = vrot.slane %v26, %v3063
    %3066 = vbcast.lane.b32.xlu0 %v3064, 256
    %v3067 = vpop.permute.xlu0 %3066
    %v3068 = vlaneseq
    %v3069 = vshrl.u32 %v3068, 7
    %v3070 = vsub.s32 7, %v3069
    %v3071 = vrot.slane %v26, %v3070
    %3073 = vbcast.lane.b32.xlu0 %v3071, 256
    %v3074 = vpop.permute.xlu0 %3073
    %v3075 = vlaneseq
    %v3076 = vshrl.u32 %v3075, 7
    %v3077 = vsub.s32 0, %v3076
    %v3078 = vrot.slane %v27, %v3077
    %3080 = vbcast.lane.b32.xlu0 %v3078, 256
    %v3081 = vpop.permute.xlu0 %3080
    %v3082 = vlaneseq
    %v3083 = vshrl.u32 %v3082, 7
    %v3084 = vsub.s32 1, %v3083
    %v3085 = vrot.slane %v27, %v3084
    %3087 = vbcast.lane.b32.xlu0 %v3085, 256
    %v3088 = vpop.permute.xlu0 %3087
    %v3089 = vlaneseq
    %v3090 = vshrl.u32 %v3089, 7
    %v3091 = vsub.s32 2, %v3090
    %v3092 = vrot.slane %v27, %v3091
    %3094 = vbcast.lane.b32.xlu0 %v3092, 256
    %v3095 = vpop.permute.xlu0 %3094
    %v3096 = vlaneseq
    %v3097 = vshrl.u32 %v3096, 7
    %v3098 = vsub.s32 3, %v3097
    %v3099 = vrot.slane %v27, %v3098
    %3101 = vbcast.lane.b32.xlu0 %v3099, 256
    %v3102 = vpop.permute.xlu0 %3101
    %v3103 = vlaneseq
    %v3104 = vshrl.u32 %v3103, 7
    %v3105 = vsub.s32 4, %v3104
    %v3106 = vrot.slane %v27, %v3105
    %3108 = vbcast.lane.b32.xlu0 %v3106, 256
    %v3109 = vpop.permute.xlu0 %3108
    %v3110 = vlaneseq
    %v3111 = vshrl.u32 %v3110, 7
    %v3112 = vsub.s32 5, %v3111
    %v3113 = vrot.slane %v27, %v3112
    %3115 = vbcast.lane.b32.xlu0 %v3113, 256
    %v3116 = vpop.permute.xlu0 %3115
    %v3117 = vlaneseq
    %v3118 = vshrl.u32 %v3117, 7
    %v3119 = vsub.s32 6, %v3118
    %v3120 = vrot.slane %v27, %v3119
    %3122 = vbcast.lane.b32.xlu0 %v3120, 256
    %v3123 = vpop.permute.xlu0 %3122
    %v3124 = vlaneseq
    %v3125 = vshrl.u32 %v3124, 7
    %v3126 = vsub.s32 7, %v3125
    %v3127 = vrot.slane %v27, %v3126
    %3129 = vbcast.lane.b32.xlu0 %v3127, 256
    %v3130 = vpop.permute.xlu0 %3129
    %v3131 = vlaneseq
    %v3132 = vshrl.u32 %v3131, 7
    %v3133 = vsub.s32 0, %v3132
    %v3134 = vrot.slane %v28, %v3133
    %3136 = vbcast.lane.b32.xlu0 %v3134, 256
    %v3137 = vpop.permute.xlu0 %3136
    %v3138 = vlaneseq
    %v3139 = vshrl.u32 %v3138, 7
    %v3140 = vsub.s32 1, %v3139
    %v3141 = vrot.slane %v28, %v3140
    %3143 = vbcast.lane.b32.xlu0 %v3141, 256
    %v3144 = vpop.permute.xlu0 %3143
    %v3145 = vlaneseq
    %v3146 = vshrl.u32 %v3145, 7
    %v3147 = vsub.s32 2, %v3146
    %v3148 = vrot.slane %v28, %v3147
    %3150 = vbcast.lane.b32.xlu0 %v3148, 256
    %v3151 = vpop.permute.xlu0 %3150
    %v3152 = vlaneseq
    %v3153 = vshrl.u32 %v3152, 7
    %v3154 = vsub.s32 3, %v3153
    %v3155 = vrot.slane %v28, %v3154
    %3157 = vbcast.lane.b32.xlu0 %v3155, 256
    %v3158 = vpop.permute.xlu0 %3157
    %v3159 = vlaneseq
    %v3160 = vshrl.u32 %v3159, 7
    %v3161 = vsub.s32 4, %v3160
    %v3162 = vrot.slane %v28, %v3161
    %3164 = vbcast.lane.b32.xlu0 %v3162, 256
    %v3165 = vpop.permute.xlu0 %3164
    %v3166 = vlaneseq
    %v3167 = vshrl.u32 %v3166, 7
    %v3168 = vsub.s32 5, %v3167
    %v3169 = vrot.slane %v28, %v3168
    %3171 = vbcast.lane.b32.xlu0 %v3169, 256
    %v3172 = vpop.permute.xlu0 %3171
    %v3173 = vlaneseq
    %v3174 = vshrl.u32 %v3173, 7
    %v3175 = vsub.s32 6, %v3174
    %v3176 = vrot.slane %v28, %v3175
    %3178 = vbcast.lane.b32.xlu0 %v3176, 256
    %v3179 = vpop.permute.xlu0 %3178
    %v3180 = vlaneseq
    %v3181 = vshrl.u32 %v3180, 7
    %v3182 = vsub.s32 7, %v3181
    %v3183 = vrot.slane %v28, %v3182
    %3185 = vbcast.lane.b32.xlu0 %v3183, 256
    %v3186 = vpop.permute.xlu0 %3185
    %v3187 = vlaneseq
    %v3188 = vshrl.u32 %v3187, 7
    %v3189 = vsub.s32 0, %v3188
    %v3190 = vrot.slane %v29, %v3189
    %3192 = vbcast.lane.b32.xlu0 %v3190, 256
    %v3193 = vpop.permute.xlu0 %3192
    %v3194 = vlaneseq
    %v3195 = vshrl.u32 %v3194, 7
    %v3196 = vsub.s32 1, %v3195
    %v3197 = vrot.slane %v29, %v3196
    %3199 = vbcast.lane.b32.xlu0 %v3197, 256
    %v3200 = vpop.permute.xlu0 %3199
    %v3201 = vlaneseq
    %v3202 = vshrl.u32 %v3201, 7
    %v3203 = vsub.s32 2, %v3202
    %v3204 = vrot.slane %v29, %v3203
    %3206 = vbcast.lane.b32.xlu0 %v3204, 256
    %v3207 = vpop.permute.xlu0 %3206
    %v3208 = vlaneseq
    %v3209 = vshrl.u32 %v3208, 7
    %v3210 = vsub.s32 3, %v3209
    %v3211 = vrot.slane %v29, %v3210
    %3213 = vbcast.lane.b32.xlu0 %v3211, 256
    %v3214 = vpop.permute.xlu0 %3213
    %v3215 = vlaneseq
    %v3216 = vshrl.u32 %v3215, 7
    %v3217 = vsub.s32 4, %v3216
    %v3218 = vrot.slane %v29, %v3217
    %3220 = vbcast.lane.b32.xlu0 %v3218, 256
    %v3221 = vpop.permute.xlu0 %3220
    %v3222 = vlaneseq
    %v3223 = vshrl.u32 %v3222, 7
    %v3224 = vsub.s32 5, %v3223
    %v3225 = vrot.slane %v29, %v3224
    %3227 = vbcast.lane.b32.xlu0 %v3225, 256
    %v3228 = vpop.permute.xlu0 %3227
    %v3229 = vlaneseq
    %v3230 = vshrl.u32 %v3229, 7
    %v3231 = vsub.s32 6, %v3230
    %v3232 = vrot.slane %v29, %v3231
    %3234 = vbcast.lane.b32.xlu0 %v3232, 256
    %v3235 = vpop.permute.xlu0 %3234
    %v3236 = vlaneseq
    %v3237 = vshrl.u32 %v3236, 7
    %v3238 = vsub.s32 7, %v3237
    %v3239 = vrot.slane %v29, %v3238
    %3241 = vbcast.lane.b32.xlu0 %v3239, 256
    %v3242 = vpop.permute.xlu0 %3241
    %v3243 = vlaneseq
    %v3244 = vshrl.u32 %v3243, 7
    %v3245 = vsub.s32 0, %v3244
    %v3246 = vrot.slane %v30, %v3245
    %3248 = vbcast.lane.b32.xlu0 %v3246, 256
    %v3249 = vpop.permute.xlu0 %3248
    %v3250 = vlaneseq
    %v3251 = vshrl.u32 %v3250, 7
    %v3252 = vsub.s32 1, %v3251
    %v3253 = vrot.slane %v30, %v3252
    %3255 = vbcast.lane.b32.xlu0 %v3253, 256
    %v3256 = vpop.permute.xlu0 %3255
    %v3257 = vlaneseq
    %v3258 = vshrl.u32 %v3257, 7
    %v3259 = vsub.s32 2, %v3258
    %v3260 = vrot.slane %v30, %v3259
    %3262 = vbcast.lane.b32.xlu0 %v3260, 256
    %v3263 = vpop.permute.xlu0 %3262
    %v3264 = vlaneseq
    %v3265 = vshrl.u32 %v3264, 7
    %v3266 = vsub.s32 3, %v3265
    %v3267 = vrot.slane %v30, %v3266
    %3269 = vbcast.lane.b32.xlu0 %v3267, 256
    %v3270 = vpop.permute.xlu0 %3269
    %v3271 = vlaneseq
    %v3272 = vshrl.u32 %v3271, 7
    %v3273 = vsub.s32 4, %v3272
    %v3274 = vrot.slane %v30, %v3273
    %3276 = vbcast.lane.b32.xlu0 %v3274, 256
    %v3277 = vpop.permute.xlu0 %3276
    %v3278 = vlaneseq
    %v3279 = vshrl.u32 %v3278, 7
    %v3280 = vsub.s32 5, %v3279
    %v3281 = vrot.slane %v30, %v3280
    %3283 = vbcast.lane.b32.xlu0 %v3281, 256
    %v3284 = vpop.permute.xlu0 %3283
    %v3285 = vlaneseq
    %v3286 = vshrl.u32 %v3285, 7
    %v3287 = vsub.s32 6, %v3286
    %v3288 = vrot.slane %v30, %v3287
    %3290 = vbcast.lane.b32.xlu0 %v3288, 256
    %v3291 = vpop.permute.xlu0 %3290
    %v3292 = vlaneseq
    %v3293 = vshrl.u32 %v3292, 7
    %v3294 = vsub.s32 7, %v3293
    %v3295 = vrot.slane %v30, %v3294
    %3297 = vbcast.lane.b32.xlu0 %v3295, 256
    %v3298 = vpop.permute.xlu0 %3297
    %v3363 = vmul.f32 %v2835, %v2857
    %v3364 = vmul.f32 %v2836, %v2864
    %v3365 = vmul.f32 %v2837, %v2871
    %v3366 = vmul.f32 %v2838, %v2878
    %v3367 = vmul.f32 %v2839, %v2885
    %v3368 = vmul.f32 %v2840, %v2892
    %v3369 = vmul.f32 %v2841, %v2899
    %v3370 = vmul.f32 %v2842, %v2906
    %v3371 = vmul.f32 %v2835, %v2913
    %v3372 = vmul.f32 %v2836, %v2920
    %v3373 = vmul.f32 %v2837, %v2927
    %v3374 = vmul.f32 %v2838, %v2934
    %v3375 = vmul.f32 %v2839, %v2941
    %v3376 = vmul.f32 %v2840, %v2948
    %v3377 = vmul.f32 %v2841, %v2955
    %v3378 = vmul.f32 %v2842, %v2962
    %v3379 = vmul.f32 %v2835, %v2969
    %v3380 = vmul.f32 %v2836, %v2976
    %v3381 = vmul.f32 %v2837, %v2983
    %v3382 = vmul.f32 %v2838, %v2990
    %v3383 = vmul.f32 %v2839, %v2997
    %v3384 = vmul.f32 %v2840, %v3004
    %v3385 = vmul.f32 %v2841, %v3011
    %v3386 = vmul.f32 %v2842, %v3018
    %v3387 = vmul.f32 %v2835, %v3025
    %v3388 = vmul.f32 %v2836, %v3032
    %v3389 = vmul.f32 %v2837, %v3039
    %v3390 = vmul.f32 %v2838, %v3046
    %v3391 = vmul.f32 %v2839, %v3053
    %v3392 = vmul.f32 %v2840, %v3060
    %v3393 = vmul.f32 %v2841, %v3067
    %v3394 = vmul.f32 %v2842, %v3074
    %v3395 = vmul.f32 %v2835, %v3081
    %v3396 = vmul.f32 %v2836, %v3088
    %v3397 = vmul.f32 %v2837, %v3095
    %v3398 = vmul.f32 %v2838, %v3102
    %v3399 = vmul.f32 %v2839, %v3109
    %v3400 = vmul.f32 %v2840, %v3116
    %v3401 = vmul.f32 %v2841, %v3123
    %v3402 = vmul.f32 %v2842, %v3130
    %v3403 = vmul.f32 %v2835, %v3137
    %v3404 = vmul.f32 %v2836, %v3144
    %v3405 = vmul.f32 %v2837, %v3151
    %v3406 = vmul.f32 %v2838, %v3158
    %v3407 = vmul.f32 %v2839, %v3165
    %v3408 = vmul.f32 %v2840, %v3172
    %v3409 = vmul.f32 %v2841, %v3179
    %v3410 = vmul.f32 %v2842, %v3186
    %v3411 = vmul.f32 %v2835, %v3193
    %v3412 = vmul.f32 %v2836, %v3200
    %v3413 = vmul.f32 %v2837, %v3207
    %v3414 = vmul.f32 %v2838, %v3214
    %v3415 = vmul.f32 %v2839, %v3221
    %v3416 = vmul.f32 %v2840, %v3228
    %v3417 = vmul.f32 %v2841, %v3235
    %v3418 = vmul.f32 %v2842, %v3242
    %v3419 = vmul.f32 %v2835, %v3249
    %v3420 = vmul.f32 %v2836, %v3256
    %v3421 = vmul.f32 %v2837, %v3263
    %v3422 = vmul.f32 %v2838, %v3270
    %v3423 = vmul.f32 %v2839, %v3277
    %v3424 = vmul.f32 %v2840, %v3284
    %v3425 = vmul.f32 %v2841, %v3291
    %v3426 = vmul.f32 %v2842, %v3298
    %3491 = vset.pattern.permute.xlu0 0
    %3492 = vperm.xlu0 %3491, %v3363
    %v3493 = vpop.permute.xlu0 %3492
    %3494 = vset.pattern.permute.xlu0 0
    %3495 = vperm.xlu0 %3494, %v3364
    %v3496 = vpop.permute.xlu0 %3495
    %3497 = vset.pattern.permute.xlu0 0
    %3498 = vperm.xlu0 %3497, %v3365
    %v3499 = vpop.permute.xlu0 %3498
    %3500 = vset.pattern.permute.xlu0 0
    %3501 = vperm.xlu0 %3500, %v3366
    %v3502 = vpop.permute.xlu0 %3501
    %3503 = vset.pattern.permute.xlu0 0
    %3504 = vperm.xlu0 %3503, %v3367
    %v3505 = vpop.permute.xlu0 %3504
    %3506 = vset.pattern.permute.xlu0 0
    %3507 = vperm.xlu0 %3506, %v3368
    %v3508 = vpop.permute.xlu0 %3507
    %3509 = vset.pattern.permute.xlu0 0
    %3510 = vperm.xlu0 %3509, %v3369
    %v3511 = vpop.permute.xlu0 %3510
    %3512 = vset.pattern.permute.xlu0 0
    %3513 = vperm.xlu0 %3512, %v3370
    %v3514 = vpop.permute.xlu0 %3513
    %3515 = vset.pattern.permute.xlu0 0
    %3516 = vperm.xlu0 %3515, %v3371
    %v3517 = vpop.permute.xlu0 %3516
    %3518 = vset.pattern.permute.xlu0 0
    %3519 = vperm.xlu0 %3518, %v3372
    %v3520 = vpop.permute.xlu0 %3519
    %3521 = vset.pattern.permute.xlu0 0
    %3522 = vperm.xlu0 %3521, %v3373
    %v3523 = vpop.permute.xlu0 %3522
    %3524 = vset.pattern.permute.xlu0 0
    %3525 = vperm.xlu0 %3524, %v3374
    %v3526 = vpop.permute.xlu0 %3525
    %3527 = vset.pattern.permute.xlu0 0
    %3528 = vperm.xlu0 %3527, %v3375
    %v3529 = vpop.permute.xlu0 %3528
    %3530 = vset.pattern.permute.xlu0 0
    %3531 = vperm.xlu0 %3530, %v3376
    %v3532 = vpop.permute.xlu0 %3531
    %3533 = vset.pattern.permute.xlu0 0
    %3534 = vperm.xlu0 %3533, %v3377
    %v3535 = vpop.permute.xlu0 %3534
    %3536 = vset.pattern.permute.xlu0 0
    %3537 = vperm.xlu0 %3536, %v3378
    %v3538 = vpop.permute.xlu0 %3537
    %3539 = vset.pattern.permute.xlu0 0
    %3540 = vperm.xlu0 %3539, %v3379
    %v3541 = vpop.permute.xlu0 %3540
    %3542 = vset.pattern.permute.xlu0 0
    %3543 = vperm.xlu0 %3542, %v3380
    %v3544 = vpop.permute.xlu0 %3543
    %3545 = vset.pattern.permute.xlu0 0
    %3546 = vperm.xlu0 %3545, %v3381
    %v3547 = vpop.permute.xlu0 %3546
    %3548 = vset.pattern.permute.xlu0 0
    %3549 = vperm.xlu0 %3548, %v3382
    %v3550 = vpop.permute.xlu0 %3549
    %3551 = vset.pattern.permute.xlu0 0
    %3552 = vperm.xlu0 %3551, %v3383
    %v3553 = vpop.permute.xlu0 %3552
    %3554 = vset.pattern.permute.xlu0 0
    %3555 = vperm.xlu0 %3554, %v3384
    %v3556 = vpop.permute.xlu0 %3555
    %3557 = vset.pattern.permute.xlu0 0
    %3558 = vperm.xlu0 %3557, %v3385
    %v3559 = vpop.permute.xlu0 %3558
    %3560 = vset.pattern.permute.xlu0 0
    %3561 = vperm.xlu0 %3560, %v3386
    %v3562 = vpop.permute.xlu0 %3561
    %3563 = vset.pattern.permute.xlu0 0
    %3564 = vperm.xlu0 %3563, %v3387
    %v3565 = vpop.permute.xlu0 %3564
    %3566 = vset.pattern.permute.xlu0 0
    %3567 = vperm.xlu0 %3566, %v3388
    %v3568 = vpop.permute.xlu0 %3567
    %3569 = vset.pattern.permute.xlu0 0
    %3570 = vperm.xlu0 %3569, %v3389
    %v3571 = vpop.permute.xlu0 %3570
    %3572 = vset.pattern.permute.xlu0 0
    %3573 = vperm.xlu0 %3572, %v3390
    %v3574 = vpop.permute.xlu0 %3573
    %3575 = vset.pattern.permute.xlu0 0
    %3576 = vperm.xlu0 %3575, %v3391
    %v3577 = vpop.permute.xlu0 %3576
    %3578 = vset.pattern.permute.xlu0 0
    %3579 = vperm.xlu0 %3578, %v3392
    %v3580 = vpop.permute.xlu0 %3579
    %3581 = vset.pattern.permute.xlu0 0
    %3582 = vperm.xlu0 %3581, %v3393
    %v3583 = vpop.permute.xlu0 %3582
    %3584 = vset.pattern.permute.xlu0 0
    %3585 = vperm.xlu0 %3584, %v3394
    %v3586 = vpop.permute.xlu0 %3585
    %3587 = vset.pattern.permute.xlu0 0
    %3588 = vperm.xlu0 %3587, %v3395
    %v3589 = vpop.permute.xlu0 %3588
    %3590 = vset.pattern.permute.xlu0 0
    %3591 = vperm.xlu0 %3590, %v3396
    %v3592 = vpop.permute.xlu0 %3591
    %3593 = vset.pattern.permute.xlu0 0
    %3594 = vperm.xlu0 %3593, %v3397
    %v3595 = vpop.permute.xlu0 %3594
    %3596 = vset.pattern.permute.xlu0 0
    %3597 = vperm.xlu0 %3596, %v3398
    %v3598 = vpop.permute.xlu0 %3597
    %3599 = vset.pattern.permute.xlu0 0
    %3600 = vperm.xlu0 %3599, %v3399
    %v3601 = vpop.permute.xlu0 %3600
    %3602 = vset.pattern.permute.xlu0 0
    %3603 = vperm.xlu0 %3602, %v3400
    %v3604 = vpop.permute.xlu0 %3603
    %3605 = vset.pattern.permute.xlu0 0
    %3606 = vperm.xlu0 %3605, %v3401
    %v3607 = vpop.permute.xlu0 %3606
    %3608 = vset.pattern.permute.xlu0 0
    %3609 = vperm.xlu0 %3608, %v3402
    %v3610 = vpop.permute.xlu0 %3609
    %3611 = vset.pattern.permute.xlu0 0
    %3612 = vperm.xlu0 %3611, %v3403
    %v3613 = vpop.permute.xlu0 %3612
    %3614 = vset.pattern.permute.xlu0 0
    %3615 = vperm.xlu0 %3614, %v3404
    %v3616 = vpop.permute.xlu0 %3615
    %3617 = vset.pattern.permute.xlu0 0
    %3618 = vperm.xlu0 %3617, %v3405
    %v3619 = vpop.permute.xlu0 %3618
    %3620 = vset.pattern.permute.xlu0 0
    %3621 = vperm.xlu0 %3620, %v3406
    %v3622 = vpop.permute.xlu0 %3621
    %3623 = vset.pattern.permute.xlu0 0
    %3624 = vperm.xlu0 %3623, %v3407
    %v3625 = vpop.permute.xlu0 %3624
    %3626 = vset.pattern.permute.xlu0 0
    %3627 = vperm.xlu0 %3626, %v3408
    %v3628 = vpop.permute.xlu0 %3627
    %3629 = vset.pattern.permute.xlu0 0
    %3630 = vperm.xlu0 %3629, %v3409
    %v3631 = vpop.permute.xlu0 %3630
    %3632 = vset.pattern.permute.xlu0 0
    %3633 = vperm.xlu0 %3632, %v3410
    %v3634 = vpop.permute.xlu0 %3633
    %3635 = vset.pattern.permute.xlu0 0
    %3636 = vperm.xlu0 %3635, %v3411
    %v3637 = vpop.permute.xlu0 %3636
    %3638 = vset.pattern.permute.xlu0 0
    %3639 = vperm.xlu0 %3638, %v3412
    %v3640 = vpop.permute.xlu0 %3639
    %3641 = vset.pattern.permute.xlu0 0
    %3642 = vperm.xlu0 %3641, %v3413
    %v3643 = vpop.permute.xlu0 %3642
    %3644 = vset.pattern.permute.xlu0 0
    %3645 = vperm.xlu0 %3644, %v3414
    %v3646 = vpop.permute.xlu0 %3645
    %3647 = vset.pattern.permute.xlu0 0
    %3648 = vperm.xlu0 %3647, %v3415
    %v3649 = vpop.permute.xlu0 %3648
    %3650 = vset.pattern.permute.xlu0 0
    %3651 = vperm.xlu0 %3650, %v3416
    %v3652 = vpop.permute.xlu0 %3651
    %3653 = vset.pattern.permute.xlu0 0
    %3654 = vperm.xlu0 %3653, %v3417
    %v3655 = vpop.permute.xlu0 %3654
    %3656 = vset.pattern.permute.xlu0 0
    %3657 = vperm.xlu0 %3656, %v3418
    %v3658 = vpop.permute.xlu0 %3657
    %3659 = vset.pattern.permute.xlu0 0
    %3660 = vperm.xlu0 %3659, %v3419
    %v3661 = vpop.permute.xlu0 %3660
    %3662 = vset.pattern.permute.xlu0 0
    %3663 = vperm.xlu0 %3662, %v3420
    %v3664 = vpop.permute.xlu0 %3663
    %3665 = vset.pattern.permute.xlu0 0
    %3666 = vperm.xlu0 %3665, %v3421
    %v3667 = vpop.permute.xlu0 %3666
    %3668 = vset.pattern.permute.xlu0 0
    %3669 = vperm.xlu0 %3668, %v3422
    %v3670 = vpop.permute.xlu0 %3669
    %3671 = vset.pattern.permute.xlu0 0
    %3672 = vperm.xlu0 %3671, %v3423
    %v3673 = vpop.permute.xlu0 %3672
    %3674 = vset.pattern.permute.xlu0 0
    %3675 = vperm.xlu0 %3674, %v3424
    %v3676 = vpop.permute.xlu0 %3675
    %3677 = vset.pattern.permute.xlu0 0
    %3678 = vperm.xlu0 %3677, %v3425
    %v3679 = vpop.permute.xlu0 %3678
    %3680 = vset.pattern.permute.xlu0 0
    %3681 = vperm.xlu0 %3680, %v3426
    %v3682 = vpop.permute.xlu0 %3681
    %v3683 = vlaneseq
    %v3684 = vshrl.u32 %v3683, 7
    %v3685 = vsub.s32 %v1400, %v3684
    %v3686 = vrot.slane %v3493, %v3685
    %v3687 = vlaneseq
    %v3688 = vshrl.u32 %v3687, 7
    %v3689 = vsub.s32 %v1400, %v3688
    %v3690 = vrot.slane %v3496, %v3689
    %v3691 = vlaneseq
    %v3692 = vshrl.u32 %v3691, 7
    %v3693 = vsub.s32 %v1400, %v3692
    %v3694 = vrot.slane %v3499, %v3693
    %v3695 = vlaneseq
    %v3696 = vshrl.u32 %v3695, 7
    %v3697 = vsub.s32 %v1400, %v3696
    %v3698 = vrot.slane %v3502, %v3697
    %v3699 = vlaneseq
    %v3700 = vshrl.u32 %v3699, 7
    %v3701 = vsub.s32 %v1400, %v3700
    %v3702 = vrot.slane %v3505, %v3701
    %v3703 = vlaneseq
    %v3704 = vshrl.u32 %v3703, 7
    %v3705 = vsub.s32 %v1400, %v3704
    %v3706 = vrot.slane %v3508, %v3705
    %v3707 = vlaneseq
    %v3708 = vshrl.u32 %v3707, 7
    %v3709 = vsub.s32 %v1400, %v3708
    %v3710 = vrot.slane %v3511, %v3709
    %v3711 = vlaneseq
    %v3712 = vshrl.u32 %v3711, 7
    %v3713 = vsub.s32 %v1400, %v3712
    %v3714 = vrot.slane %v3514, %v3713
    %v3715 = vlaneseq
    %v3716 = vshrl.u32 %v3715, 7
    %v3717 = vsub.s32 %v1400, %v3716
    %v3718 = vrot.slane %v3517, %v3717
    %v3719 = vlaneseq
    %v3720 = vshrl.u32 %v3719, 7
    %v3721 = vsub.s32 %v1400, %v3720
    %v3722 = vrot.slane %v3520, %v3721
    %v3723 = vlaneseq
    %v3724 = vshrl.u32 %v3723, 7
    %v3725 = vsub.s32 %v1400, %v3724
    %v3726 = vrot.slane %v3523, %v3725
    %v3727 = vlaneseq
    %v3728 = vshrl.u32 %v3727, 7
    %v3729 = vsub.s32 %v1400, %v3728
    %v3730 = vrot.slane %v3526, %v3729
    %v3731 = vlaneseq
    %v3732 = vshrl.u32 %v3731, 7
    %v3733 = vsub.s32 %v1400, %v3732
    %v3734 = vrot.slane %v3529, %v3733
    %v3735 = vlaneseq
    %v3736 = vshrl.u32 %v3735, 7
    %v3737 = vsub.s32 %v1400, %v3736
    %v3738 = vrot.slane %v3532, %v3737
    %v3739 = vlaneseq
    %v3740 = vshrl.u32 %v3739, 7
    %v3741 = vsub.s32 %v1400, %v3740
    %v3742 = vrot.slane %v3535, %v3741
    %v3743 = vlaneseq
    %v3744 = vshrl.u32 %v3743, 7
    %v3745 = vsub.s32 %v1400, %v3744
    %v3746 = vrot.slane %v3538, %v3745
    %v3747 = vlaneseq
    %v3748 = vshrl.u32 %v3747, 7
    %v3749 = vsub.s32 %v1400, %v3748
    %v3750 = vrot.slane %v3541, %v3749
    %v3751 = vlaneseq
    %v3752 = vshrl.u32 %v3751, 7
    %v3753 = vsub.s32 %v1400, %v3752
    %v3754 = vrot.slane %v3544, %v3753
    %v3755 = vlaneseq
    %v3756 = vshrl.u32 %v3755, 7
    %v3757 = vsub.s32 %v1400, %v3756
    %v3758 = vrot.slane %v3547, %v3757
    %v3759 = vlaneseq
    %v3760 = vshrl.u32 %v3759, 7
    %v3761 = vsub.s32 %v1400, %v3760
    %v3762 = vrot.slane %v3550, %v3761
    %v3763 = vlaneseq
    %v3764 = vshrl.u32 %v3763, 7
    %v3765 = vsub.s32 %v1400, %v3764
    %v3766 = vrot.slane %v3553, %v3765
    %v3767 = vlaneseq
    %v3768 = vshrl.u32 %v3767, 7
    %v3769 = vsub.s32 %v1400, %v3768
    %v3770 = vrot.slane %v3556, %v3769
    %v3771 = vlaneseq
    %v3772 = vshrl.u32 %v3771, 7
    %v3773 = vsub.s32 %v1400, %v3772
    %v3774 = vrot.slane %v3559, %v3773
    %v3775 = vlaneseq
    %v3776 = vshrl.u32 %v3775, 7
    %v3777 = vsub.s32 %v1400, %v3776
    %v3778 = vrot.slane %v3562, %v3777
    %v3779 = vlaneseq
    %v3780 = vshrl.u32 %v3779, 7
    %v3781 = vsub.s32 %v1400, %v3780
    %v3782 = vrot.slane %v3565, %v3781
    %v3783 = vlaneseq
    %v3784 = vshrl.u32 %v3783, 7
    %v3785 = vsub.s32 %v1400, %v3784
    %v3786 = vrot.slane %v3568, %v3785
    %v3787 = vlaneseq
    %v3788 = vshrl.u32 %v3787, 7
    %v3789 = vsub.s32 %v1400, %v3788
    %v3790 = vrot.slane %v3571, %v3789
    %v3791 = vlaneseq
    %v3792 = vshrl.u32 %v3791, 7
    %v3793 = vsub.s32 %v1400, %v3792
    %v3794 = vrot.slane %v3574, %v3793
    %v3795 = vlaneseq
    %v3796 = vshrl.u32 %v3795, 7
    %v3797 = vsub.s32 %v1400, %v3796
    %v3798 = vrot.slane %v3577, %v3797
    %v3799 = vlaneseq
    %v3800 = vshrl.u32 %v3799, 7
    %v3801 = vsub.s32 %v1400, %v3800
    %v3802 = vrot.slane %v3580, %v3801
    %v3803 = vlaneseq
    %v3804 = vshrl.u32 %v3803, 7
    %v3805 = vsub.s32 %v1400, %v3804
    %v3806 = vrot.slane %v3583, %v3805
    %v3807 = vlaneseq
    %v3808 = vshrl.u32 %v3807, 7
    %v3809 = vsub.s32 %v1400, %v3808
    %v3810 = vrot.slane %v3586, %v3809
    %v3811 = vlaneseq
    %v3812 = vshrl.u32 %v3811, 7
    %v3813 = vsub.s32 %v1400, %v3812
    %v3814 = vrot.slane %v3589, %v3813
    %v3815 = vlaneseq
    %v3816 = vshrl.u32 %v3815, 7
    %v3817 = vsub.s32 %v1400, %v3816
    %v3818 = vrot.slane %v3592, %v3817
    %v3819 = vlaneseq
    %v3820 = vshrl.u32 %v3819, 7
    %v3821 = vsub.s32 %v1400, %v3820
    %v3822 = vrot.slane %v3595, %v3821
    %v3823 = vlaneseq
    %v3824 = vshrl.u32 %v3823, 7
    %v3825 = vsub.s32 %v1400, %v3824
    %v3826 = vrot.slane %v3598, %v3825
    %v3827 = vlaneseq
    %v3828 = vshrl.u32 %v3827, 7
    %v3829 = vsub.s32 %v1400, %v3828
    %v3830 = vrot.slane %v3601, %v3829
    %v3831 = vlaneseq
    %v3832 = vshrl.u32 %v3831, 7
    %v3833 = vsub.s32 %v1400, %v3832
    %v3834 = vrot.slane %v3604, %v3833
    %v3835 = vlaneseq
    %v3836 = vshrl.u32 %v3835, 7
    %v3837 = vsub.s32 %v1400, %v3836
    %v3838 = vrot.slane %v3607, %v3837
    %v3839 = vlaneseq
    %v3840 = vshrl.u32 %v3839, 7
    %v3841 = vsub.s32 %v1400, %v3840
    %v3842 = vrot.slane %v3610, %v3841
    %v3843 = vlaneseq
    %v3844 = vshrl.u32 %v3843, 7
    %v3845 = vsub.s32 %v1400, %v3844
    %v3846 = vrot.slane %v3613, %v3845
    %v3847 = vlaneseq
    %v3848 = vshrl.u32 %v3847, 7
    %v3849 = vsub.s32 %v1400, %v3848
    %v3850 = vrot.slane %v3616, %v3849
    %v3851 = vlaneseq
    %v3852 = vshrl.u32 %v3851, 7
    %v3853 = vsub.s32 %v1400, %v3852
    %v3854 = vrot.slane %v3619, %v3853
    %v3855 = vlaneseq
    %v3856 = vshrl.u32 %v3855, 7
    %v3857 = vsub.s32 %v1400, %v3856
    %v3858 = vrot.slane %v3622, %v3857
    %v3859 = vlaneseq
    %v3860 = vshrl.u32 %v3859, 7
    %v3861 = vsub.s32 %v1400, %v3860
    %v3862 = vrot.slane %v3625, %v3861
    %v3863 = vlaneseq
    %v3864 = vshrl.u32 %v3863, 7
    %v3865 = vsub.s32 %v1400, %v3864
    %v3866 = vrot.slane %v3628, %v3865
    %v3867 = vlaneseq
    %v3868 = vshrl.u32 %v3867, 7
    %v3869 = vsub.s32 %v1400, %v3868
    %v3870 = vrot.slane %v3631, %v3869
    %v3871 = vlaneseq
    %v3872 = vshrl.u32 %v3871, 7
    %v3873 = vsub.s32 %v1400, %v3872
    %v3874 = vrot.slane %v3634, %v3873
    %v3875 = vlaneseq
    %v3876 = vshrl.u32 %v3875, 7
    %v3877 = vsub.s32 %v1400, %v3876
    %v3878 = vrot.slane %v3637, %v3877
    %v3879 = vlaneseq
    %v3880 = vshrl.u32 %v3879, 7
    %v3881 = vsub.s32 %v1400, %v3880
    %v3882 = vrot.slane %v3640, %v3881
    %v3883 = vlaneseq
    %v3884 = vshrl.u32 %v3883, 7
    %v3885 = vsub.s32 %v1400, %v3884
    %v3886 = vrot.slane %v3643, %v3885
    %v3887 = vlaneseq
    %v3888 = vshrl.u32 %v3887, 7
    %v3889 = vsub.s32 %v1400, %v3888
    %v3890 = vrot.slane %v3646, %v3889
    %v3891 = vlaneseq
    %v3892 = vshrl.u32 %v3891, 7
    %v3893 = vsub.s32 %v1400, %v3892
    %v3894 = vrot.slane %v3649, %v3893
    %v3895 = vlaneseq
    %v3896 = vshrl.u32 %v3895, 7
    %v3897 = vsub.s32 %v1400, %v3896
    %v3898 = vrot.slane %v3652, %v3897
    %v3899 = vlaneseq
    %v3900 = vshrl.u32 %v3899, 7
    %v3901 = vsub.s32 %v1400, %v3900
    %v3902 = vrot.slane %v3655, %v3901
    %v3903 = vlaneseq
    %v3904 = vshrl.u32 %v3903, 7
    %v3905 = vsub.s32 %v1400, %v3904
    %v3906 = vrot.slane %v3658, %v3905
    %v3907 = vlaneseq
    %v3908 = vshrl.u32 %v3907, 7
    %v3909 = vsub.s32 %v1400, %v3908
    %v3910 = vrot.slane %v3661, %v3909
    %v3911 = vlaneseq
    %v3912 = vshrl.u32 %v3911, 7
    %v3913 = vsub.s32 %v1400, %v3912
    %v3914 = vrot.slane %v3664, %v3913
    %v3915 = vlaneseq
    %v3916 = vshrl.u32 %v3915, 7
    %v3917 = vsub.s32 %v1400, %v3916
    %v3918 = vrot.slane %v3667, %v3917
    %v3919 = vlaneseq
    %v3920 = vshrl.u32 %v3919, 7
    %v3921 = vsub.s32 %v1400, %v3920
    %v3922 = vrot.slane %v3670, %v3921
    %v3923 = vlaneseq
    %v3924 = vshrl.u32 %v3923, 7
    %v3925 = vsub.s32 %v1400, %v3924
    %v3926 = vrot.slane %v3673, %v3925
    %v3927 = vlaneseq
    %v3928 = vshrl.u32 %v3927, 7
    %v3929 = vsub.s32 %v1400, %v3928
    %v3930 = vrot.slane %v3676, %v3929
    %v3931 = vlaneseq
    %v3932 = vshrl.u32 %v3931, 7
    %v3933 = vsub.s32 %v1400, %v3932
    %v3934 = vrot.slane %v3679, %v3933
    %v3935 = vlaneseq
    %v3936 = vshrl.u32 %v3935, 7
    %v3937 = vsub.s32 %v1400, %v3936
    %v3938 = vrot.slane %v3682, %v3937
    %v3939 = vsel %vm1657, %v3690, %v3686
    %v3940 = vsel %vm1659, %v3694, %v3939
    %v3941 = vsel %vm1661, %v3698, %v3940
    %v3942 = vsel %vm1663, %v3702, %v3941
    %v3943 = vsel %vm1665, %v3706, %v3942
    %v3944 = vsel %vm1667, %v3710, %v3943
    %v3945 = vsel %vm1669, %v3714, %v3944
    %v3946 = vsel %vm1657, %v3722, %v3718
    %v3947 = vsel %vm1659, %v3726, %v3946
    %v3948 = vsel %vm1661, %v3730, %v3947
    %v3949 = vsel %vm1663, %v3734, %v3948
    %v3950 = vsel %vm1665, %v3738, %v3949
    %v3951 = vsel %vm1667, %v3742, %v3950
    %v3952 = vsel %vm1669, %v3746, %v3951
    %v3953 = vsel %vm1657, %v3754, %v3750
    %v3954 = vsel %vm1659, %v3758, %v3953
    %v3955 = vsel %vm1661, %v3762, %v3954
    %v3956 = vsel %vm1663, %v3766, %v3955
    %v3957 = vsel %vm1665, %v3770, %v3956
    %v3958 = vsel %vm1667, %v3774, %v3957
    %v3959 = vsel %vm1669, %v3778, %v3958
    %v3960 = vsel %vm1657, %v3786, %v3782
    %v3961 = vsel %vm1659, %v3790, %v3960
    %v3962 = vsel %vm1661, %v3794, %v3961
    %v3963 = vsel %vm1663, %v3798, %v3962
    %v3964 = vsel %vm1665, %v3802, %v3963
    %v3965 = vsel %vm1667, %v3806, %v3964
    %v3966 = vsel %vm1669, %v3810, %v3965
    %v3967 = vsel %vm1657, %v3818, %v3814
    %v3968 = vsel %vm1659, %v3822, %v3967
    %v3969 = vsel %vm1661, %v3826, %v3968
    %v3970 = vsel %vm1663, %v3830, %v3969
    %v3971 = vsel %vm1665, %v3834, %v3970
    %v3972 = vsel %vm1667, %v3838, %v3971
    %v3973 = vsel %vm1669, %v3842, %v3972
    %v3974 = vsel %vm1657, %v3850, %v3846
    %v3975 = vsel %vm1659, %v3854, %v3974
    %v3976 = vsel %vm1661, %v3858, %v3975
    %v3977 = vsel %vm1663, %v3862, %v3976
    %v3978 = vsel %vm1665, %v3866, %v3977
    %v3979 = vsel %vm1667, %v3870, %v3978
    %v3980 = vsel %vm1669, %v3874, %v3979
    %v3981 = vsel %vm1657, %v3882, %v3878
    %v3982 = vsel %vm1659, %v3886, %v3981
    %v3983 = vsel %vm1661, %v3890, %v3982
    %v3984 = vsel %vm1663, %v3894, %v3983
    %v3985 = vsel %vm1665, %v3898, %v3984
    %v3986 = vsel %vm1667, %v3902, %v3985
    %v3987 = vsel %vm1669, %v3906, %v3986
    %v3988 = vsel %vm1657, %v3914, %v3910
    %v3989 = vsel %vm1659, %v3918, %v3988
    %v3990 = vsel %vm1661, %v3922, %v3989
    %v3991 = vsel %vm1663, %v3926, %v3990
    %v3992 = vsel %vm1665, %v3930, %v3991
    %v3993 = vsel %vm1667, %v3934, %v3992
    %v3994 = vsel %vm1669, %v3938, %v3993
    %4003 = vst.msk [vmem:[#allocation5] sm:$0xff] %vm31, %v3945
    %4004 = vst.msk [vmem:[#allocation5 + $0x8] sm:$0xff] %vm31, %v3952
    %4005 = vst.msk [vmem:[#allocation5 + $0x10] sm:$0xff] %vm31, %v3959
    %4006 = vst.msk [vmem:[#allocation5 + $0x18] sm:$0xff] %vm31, %v3966
    %4007 = vst.msk [vmem:[#allocation5 + $0x20] sm:$0xff] %vm31, %v3973
    %4008 = vst.msk [vmem:[#allocation5 + $0x28] sm:$0xff] %vm31, %v3980
    %4009 = vst.msk [vmem:[#allocation5 + $0x30] sm:$0xff] %vm31, %v3987
    %4010 = vst.msk [vmem:[#allocation5 + $0x38] sm:$0xff] %vm31, %v3994
    // Predicated region
    $region10: #{tpu_custom_call.1} parent=1 // pred_check
      _
    $region11: #{tpu_custom_call.1} parent=1 // pred_check_branch
      %4012 = sbr.rel (0) target = $region13
    $region12: #{tpu_custom_call.1} parent=1 // pred_region
      %s4014 = ssub.s32 1024, 1024
      %4015 = vsyncadd [#allocation4], %s4014
      %s4016 = sshll.u32 [#allocation5], 4
      %s4017 = int_to_ptr.vmem [resolvable:$true] %s4016
      %4022 = dma.vmem_to_hbm [thread:$0]  %s4017, 1024, %s1, [#allocation4], 128, 128, 8
    $region13: #{tpu_custom_call.1} parent=1 // pred_fallthru
      _
    // Predicated region
    $region14: #{tpu_custom_call.1} parent=1 // pred_check
      _
    $region15: #{tpu_custom_call.1} parent=1 // pred_check_branch
      %4024 = sbr.rel (0) target = $region17
    $region16: #{tpu_custom_call.1} parent=1 // pred_region
      %4025 = dma.done [#allocation4], 1024
    $region17: #{tpu_custom_call.1} parent=1 // pred_fallthru
      _
    %4026 = vsyncpa [#allocation3], 1
    %4027 = vsyncpa [#allocation4], 1

</llo_original>
